<compile_context>
chip_gen: v7x
topology: tpu7x:2x2x1
jax: 0.10.0
libtpu: 0.0.40
codegen_flags: <defaults>
</compile_context>

<pallas_src>
import numpy as np
import jax
import jax.numpy as jnp
from jax import lax
from jax.experimental import pallas as pl
from jax.experimental.pallas import tpu as pltpu


VOCAB_CHUNK = 256      # lane-aligned vocab tile for the one-hot embedding matmul
_GRN_SEL_ROWS = 8      # pad the block-diag GRN selector to a full sublane tile


# ----------------------------- small math helpers ---------------------------

def _erf(x):
    # Abramowitz & Stegun 7.1.26 rational approximation (reference path only).
    a1, a2, a3, a4, a5 = 0.254829592, -0.284496736, 1.421413741, -1.453152027, 1.061405429
    p = 0.3275911
    s = jnp.sign(x)
    ax = jnp.abs(x)
    t = 1.0 / (1.0 + p * ax)
    poly = ((((a5 * t + a4) * t + a3) * t + a2) * t + a1) * t
    return s * (1.0 - poly * jnp.exp(-ax * ax))


def _gelu_exact(x):
    # matches torch.nn.GELU() (erf formulation) -- used by the JAX reference.
    return 0.5 * x * (1.0 + _erf(x * 0.7071067811865476))


def _gelu_tanh(x):
    # tanh-approximate GELU: the tanh routes to the EUP slot.
    c = 0.7978845608028654  # sqrt(2/pi)
    return 0.5 * x * (1.0 + jnp.tanh(c * (x + 0.044715 * x * x * x)))


def precompute_freqs_cis(dim, end, theta=10000.0, theta_rescale_factor=1.0):
    theta = theta * theta_rescale_factor ** (dim / (dim - 2))
    freqs = 1.0 / theta ** (jnp.arange(0, dim, 2)[: dim // 2].astype(jnp.float32) / dim)
    t = jnp.arange(end).astype(jnp.float32)
    freqs = jnp.outer(t, freqs)
    return jnp.concatenate([jnp.cos(freqs), jnp.sin(freqs)], axis=-1).astype(jnp.float32)


def _round_up(n, m):
    return ((n + m - 1) // m) * m


def _vmem_tile_bytes(shape, dtype):
    # Conservative padded-VMEM footprint of one buffer of `shape`.
    itemsize = jnp.dtype(dtype).itemsize
    dims = list(shape)
    if len(dims) >= 1:
        dims[-1] = _round_up(dims[-1], 128)
    if len(dims) >= 2:
        dims[-2] = _round_up(dims[-2], 16 if itemsize == 2 else 8)
    n = 1
    for d in dims:
        n *= d
    return n * itemsize


# --------------------------------- kernel -----------------------------------

def text_embedding_kernel(
    cutoff_ref,            # scalar-prefetch: (1,) int32, max valid length over batch
    tok_ref,               # (TB, S, 1) int32 tokens of this batch block
    emb_ref,               # (Vp, D)    bf16 embedding table (vocab padded to VOCAB_CHUNK)
    freqs_ref,             # (S, D)     f32 freqs_cis rows [0, S)
    dww_ref,               # (L, 7, D)  f32 depthwise conv weights (tap-major)
    dwb_ref,               # (L, 1, D)  f32 depthwise conv bias
    lnw_ref, lnb_ref,      # (L, 1, D)  f32 LayerNorm weight / bias
    p1w_ref,               # (L, D, I)  bf16 pwconv1 weight (transposed torch Linear)
    p1b_ref,               # (L, 1, I)  f32 pwconv1 bias
    gg_ref, gb_ref,        # (L, 1, I)  f32 GRN gamma / beta
    p2w_ref,               # (L, I, D)  bf16 pwconv2 weight
    p2b_ref,               # (L, 1, D)  f32 pwconv2 bias
    out_ref,               # (TB, S, D)
):
    TB, S, _ = tok_ref.shape
    Vp, D = emb_ref.shape
    L = dww_ref.shape[0]
    I = p1w_ref.shape[2]
    R = TB * S
    cutoff = cutoff_ref[0]

    # ---- hoisted index helpers (shared by all layers) -----------------------
    pos1 = lax.broadcasted_iota(jnp.int32, (S, 1), 0)
    pos = pos1 if TB == 1 else jnp.concatenate([pos1] * TB, axis=0)   # (R,1) position within sequence
    valid = pos < cutoff

    # Per-tap masks: tap k reads x[t + (k-3)] within its own sequence; these
    # block both the roll wrap-around and any cross-batch reads.
    tap_masks = []
    for k in range(7):
        off = k - 3
        tap_masks.append(jnp.logical_and(pos + off >= 0, pos + off < S))

    # Block-diagonal selector: row b has ones over columns [b*S, (b+1)*S).
    # Used to run the per-batch GRN sequence reduction on the (idle) MXU.
    rb = lax.broadcasted_iota(jnp.int32, (_GRN_SEL_ROWS, R), 0)
    rc = lax.broadcasted_iota(jnp.int32, (_GRN_SEL_ROWS, R), 1)
    lo = rb * S
    sel = jnp.logical_and(rc >= lo, rc < lo + S).astype(jnp.bfloat16)  # rows >= TB are all-zero

    # ---- embedding lookup: vocab-chunked bf16 one-hot matmul (MXU) ----------
    # TODO(synk): torch nn.Embedding errors on index -1 inside the cut window;
    # we clamp to row 0 (only the padded region can be -1 in well-formed batches).
    tok_cols = [tok_ref[b] for b in range(TB)]                 # each (S,1) int32
    tok = tok_cols[0] if TB == 1 else jnp.concatenate(tok_cols, axis=0)
    tok = jnp.maximum(tok, 0)                                  # (R,1)

    lane_ids = lax.broadcasted_iota(jnp.int32, (R, VOCAB_CHUNK), 1)
    x = None
    for c in range(Vp // VOCAB_CHUNK):
        # subtract the chunk offset from the (R,1) token column (cheap) instead
        # of adding it to the (R,256) lane iota; init x from the chunk-0 dot.
        onehot = ((tok - c * VOCAB_CHUNK) == lane_ids).astype(jnp.bfloat16)
        contrib = jnp.dot(onehot, emb_ref[pl.ds(c * VOCAB_CHUNK, VOCAB_CHUNK), :],
                          preferred_element_type=jnp.float32)
        x = contrib if x is None else x + contrib

    freqs = freqs_ref[...]
    freqs_full = freqs if TB == 1 else jnp.concatenate([freqs] * TB, axis=0)
    x = x + freqs_full
    x = jnp.where(valid, x, 0.0)                               # == text[:, :cutoff]

    for l in range(L):                                         # ConvNeXtV2 blocks
        residual = x

        # depthwise Conv1d k=7 pad=3: XLU roll + edge mask (zeros past the cut
        # already emulate the conv's zero padding inside the valid window).
        w = dww_ref[l]                                         # (7, D)
        acc = jnp.zeros((R, D), jnp.float32)
        for k in range(7):
            off = k - 3
            xs = x if off == 0 else pltpu.roll(x, (-off) % R, axis=0)
            acc = acc + jnp.where(tap_masks[k], xs, 0.0) * w[k:k + 1, :]
        y = acc + dwb_ref[l]                                   # (R, D)

        # LayerNorm(eps=1e-6) over channels, fused single-pass statistics
        mu = jnp.mean(y, axis=-1, keepdims=True)
        var = jnp.mean(y * y, axis=-1, keepdims=True) - mu * mu
        y = (y - mu) * lax.rsqrt(var + 1e-6)
        y = y * lnw_ref[l] + lnb_ref[l]

        # pwconv1 (bf16 MXU, f32 accumulate, M = TB*S) + tanh GELU (EUP)
        h = jnp.dot(y.astype(jnp.bfloat16), p1w_ref[l],
                    preferred_element_type=jnp.float32) + p1b_ref[l]
        h = _gelu_tanh(h)

        # GRN: L2 norm over the *sequence* dim per batch element (torch dim=1);
        # positions past the cut contribute nothing; the per-batch sum of h^2
        # is a block-diagonal matmul on the MXU.
        h = jnp.where(valid, h, 0.0)
        hh = (h * h).astype(jnp.bfloat16)
        gx = jnp.sqrt(jnp.dot(sel, hh, preferred_element_type=jnp.float32))   # (8, I)
        inv = pl.reciprocal(jnp.mean(gx, axis=-1, keepdims=True) + 1e-6, approx=True)
        nx = gx * inv                                                          # (8, I)
        if TB == 1:
            nx_full = nx[0:1, :]
        else:
            nx_full = jnp.concatenate(
                [jnp.broadcast_to(nx[b:b + 1, :], (S, I)) for b in range(TB)], axis=0)
        h = gg_ref[l] * (h * nx_full) + gb_ref[l] + h

        # pwconv2 (bf16 MXU, f32 accumulate) + residual; re-zero the cut region
        # (== F.pad back to full length with zeros).
        x = residual + jnp.dot(h.astype(jnp.bfloat16), p2w_ref[l],
                               preferred_element_type=jnp.float32) + p2b_ref[l]
        x = jnp.where(valid, x, 0.0)

    for b in range(TB):
        out_ref[b] = x[b * S:(b + 1) * S, :].astype(out_ref.dtype)


# ------------------------------- host wrapper --------------------------------

def text_embedding(text, params, freqs_cis, *, batch_block=None,
                   out_dtype=jnp.float32, core_parallel=False):
    """text: (B, S) int32 with -1 padding.  Returns (B, S, D) `out_dtype`.

    batch_block: batch elements per grid step (halve on v7x if VMEM-pressured).
    core_parallel: set True on v7x to split the batch grid across the 2 TCs.
    out_dtype: pass jnp.bfloat16 if downstream consumers run in bf16 (halves
               the dominant per-step HBM writeback).
    """
    B, S = text.shape
    V1, D = params["emb"].shape
    L = params["dw_w"].shape[0]
    I = params["pw1_w"].shape[2]

    TB = batch_block if batch_block is not None else min(B, 4)
    TB = max(1, min(TB, B))
    B_pad = _round_up(B, TB)
    n_steps = B_pad // TB

    # Pad vocab up to a lane-aligned multiple of VOCAB_CHUNK (zero rows never
    # match a clamped token id) and cast MXU operands to bf16.
    Vp = _round_up(V1, VOCAB_CHUNK)
    emb_bf16 = jnp.zeros((Vp, D), jnp.bfloat16).at[:V1].set(
        params["emb"].astype(jnp.bfloat16))
    pw1_w_bf16 = params["pw1_w"].astype(jnp.bfloat16)
    pw2_w_bf16 = params["pw2_w"].astype(jnp.bfloat16)

    text_i = text.astype(jnp.int32)
    if B_pad != B:
        text_i = jnp.concatenate(
            [text_i, jnp.full((B_pad - B, S), -1, jnp.int32)], axis=0)
    cutoff = jnp.max(jnp.sum((text_i != -1).astype(jnp.int32), axis=1)).astype(jnp.int32).reshape(1)
    tok3 = text_i.reshape(B_pad, S, 1)
    freqs_s = freqs_cis[:S].astype(jnp.float32)

    # --- right-sized VMEM budget (resident weights + I/O double buffers +
    # activation estimate, +25%), clamped well under v7x's 64 MiB per-TC VMEM.
    resident_shapes = [
        ((Vp, D), jnp.bfloat16), ((S, D), jnp.float32),
        ((L, 7, D), jnp.float32), ((L, 1, D), jnp.float32),
        ((L, 1, D), jnp.float32), ((L, 1, D), jnp.float32),
        ((L, D, I), jnp.bfloat16), ((L, 1, I), jnp.float32),
        ((L, 1, I), jnp.float32), ((L, 1, I), jnp.float32),
        ((L, I, D), jnp.bfloat16), ((L, 1, D), jnp.float32),
    ]
    resident_bytes = sum(_vmem_tile_bytes(s, d) for s, d in resident_shapes)
    io_bytes = (2 * _vmem_tile_bytes((TB, S, 1), jnp.int32)
                + 2 * _vmem_tile_bytes((TB, S, D), out_dtype))
    act_bytes = 10 * _vmem_tile_bytes((TB * S, max(D, I, VOCAB_CHUNK)), jnp.float32)
    vmem_limit = int(1.25 * (resident_bytes + io_bytes + act_bytes))
    vmem_limit = min(max(vmem_limit, 16 * 1024 * 1024), 48 * 1024 * 1024)

    def resident_spec(shape):
        # Grid-invariant operand: constant index_map + single buffering
        # (double-buffering a block that never changes is pure VMEM waste).
        zeros = (0,) * len(shape)

        def index_map(g, cut):
            return zeros

        return pl.BlockSpec(shape, index_map, pipeline_mode=pl.Buffered(1))

    grid_spec = pltpu.PrefetchScalarGridSpec(
        num_scalar_prefetch=1,
        grid=(n_steps,),
        in_specs=[
            pl.BlockSpec((TB, S, 1), lambda g, cut: (g, 0, 0)),   # tokens (per-step batch block)
            resident_spec((Vp, D)),                                # embedding table (bf16)
            resident_spec((S, D)),                                 # freqs_cis[:S]
            resident_spec((L, 7, D)),                              # dwconv weight
            resident_spec((L, 1, D)),                              # dwconv bias
            resident_spec((L, 1, D)),                              # ln weight
            resident_spec((L, 1, D)),                              # ln bias
            resident_spec((L, D, I)),                              # pwconv1 weight (bf16)
            resident_spec((L, 1, I)),                              # pwconv1 bias
            resident_spec((L, 1, I)),                              # grn gamma
            resident_spec((L, 1, I)),                              # grn beta
            resident_spec((L, I, D)),                              # pwconv2 weight (bf16)
            resident_spec((L, 1, D)),                              # pwconv2 bias
        ],
        out_specs=pl.BlockSpec((TB, S, D), lambda g, cut: (g, 0, 0)),
    )

    # On v7x pass core_parallel=True so the batch grid splits across the two
    # TensorCores; default stays "parallel" (safe on single-TC v5e/v6e and for
    # grids not divisible by the core count).
    semantics = (pltpu.CORE_PARALLEL,) if core_parallel else ("parallel",)

    out = pl.pallas_call(
        text_embedding_kernel,
        out_shape=jax.ShapeDtypeStruct((B_pad, S, D), out_dtype),
        grid_spec=grid_spec,
        compiler_params=pltpu.CompilerParams(
            dimension_semantics=semantics,
            vmem_limit_bytes=vmem_limit,
        ),
    )(cutoff, tok3, emb_bf16, freqs_s,
      params["dw_w"], params["dw_b"], params["ln_w"], params["ln_b"],
      pw1_w_bf16, params["pw1_b"], params["grn_g"], params["grn_b"],
      pw2_w_bf16, params["pw2_b"])
    return out[:B] if B_pad != B else out


# ------------------------- deterministic parameter init ----------------------

def make_params(key, text_num_embeds, text_dim, conv_layers, conv_mult):
    D = text_dim
    I = text_dim * conv_mult
    L = conv_layers
    k = jax.random.split(key, 10)
    p = {}
    p["emb"] = 0.02 * jax.random.normal(k[0], (text_num_embeds + 1, D), jnp.float32)
    p["dw_w"] = 0.20 * jax.random.normal(k[1], (L, 7, D), jnp.float32)      # torch (D,1,7) transposed
    p["dw_b"] = 0.05 * jax.random.normal(k[2], (L, 1, D), jnp.float32)
    p["ln_w"] = 1.0 + 0.10 * jax.random.normal(k[3], (L, 1, D), jnp.float32)
    p["ln_b"] = 0.05 * jax.random.normal(k[4], (L, 1, D), jnp.float32)
    p["pw1_w"] = (1.0 / np.sqrt(D)) * jax.random.normal(k[5], (L, D, I), jnp.float32)
    p["pw1_b"] = 0.05 * jax.random.normal(k[6], (L, 1, I), jnp.float32)
    p["grn_g"] = 0.10 * jax.random.normal(k[7], (L, 1, I), jnp.float32)     # torch inits zeros; random to exercise GRN
    p["grn_b"] = 0.10 * jax.random.normal(k[8], (L, 1, I), jnp.float32)
    p["pw2_w"] = (1.0 / np.sqrt(I)) * jax.random.normal(k[9], (L, I, D), jnp.float32)
    p["pw2_b"] = jnp.zeros((L, 1, D), jnp.float32)
    return p


# ------------------------- plain-JAX reference (torch-faithful) --------------

def reference_text_embedding(text, params, freqs_cis):
    B, S = text.shape
    mask = np.asarray(text) != -1
    cutoff = int(mask.sum(axis=1).max())
    t = jnp.maximum(text[:, :cutoff], 0)
    x = params["emb"][t] + freqs_cis[:cutoff]
    L = params["dw_w"].shape[0]
    for l in range(L):
        residual = x
        xp = jnp.pad(x, ((0, 0), (3, 3), (0, 0)))
        y = params["dw_b"][l][None]
        for k in range(7):
            y = y + xp[:, k:k + cutoff, :] * params["dw_w"][l][k][None, None, :]
        mu = jnp.mean(y, axis=-1, keepdims=True)
        var = jnp.mean((y - mu) ** 2, axis=-1, keepdims=True)
        y = (y - mu) / jnp.sqrt(var + 1e-6) * params["ln_w"][l][None] + params["ln_b"][l][None]
        h = y @ params["pw1_w"][l] + params["pw1_b"][l][None]
        h = _gelu_exact(h)
        gx = jnp.sqrt(jnp.sum(h * h, axis=1, keepdims=True))
        nx = gx / (jnp.mean(gx, axis=-1, keepdims=True) + 1e-6)
        h = params["grn_g"][l][None] * (h * nx) + params["grn_b"][l][None] + h
        x = residual + h @ params["pw2_w"][l] + params["pw2_b"][l][None]
    return jnp.pad(x, ((0, 0), (0, S - cutoff), (0, 0)))


# ----------------------------------- main ------------------------------------

if __name__ == "__main__":
    B, S = 2, 16
    text_num_embeds, text_dim, conv_layers, conv_mult = 32, 32, 2, 2

    key = jax.random.PRNGKey(0)
    kp, kt = jax.random.split(key)
    params = make_params(kp, text_num_embeds, text_dim, conv_layers, conv_mult)
    freqs_cis = precompute_freqs_cis(text_dim, 64)

    # tokens with trailing -1 padding (same valid length per row, as the torch
    # code implicitly requires for well-defined embedding lookups)
    valid_len = 12
    tok = jax.random.randint(kt, (B, S), 0, text_num_embeds + 1, dtype=jnp.int32)
    text = jnp.where(jnp.arange(S)[None, :] >= valid_len, -1, tok)

    out = text_embedding(text, params, freqs_cis)
    out = jax.block_until_ready(out)

    with jax.default_matmul_precision("highest"):
        ref = reference_text_embedding(text, params, freqs_cis)
        ref = jax.block_until_ready(ref)

    # bf16 MXU operands + tanh GELU + approx reciprocal trade ~1e-2 absolute
    # drift vs the exact f32/erf torch path for MXU throughput; the bound below
    # comfortably covers that budget.
    np.testing.assert_allclose(np.asarray(out), np.asarray(ref), rtol=3e-2, atol=3e-2)
    print("KERNEL_OK")
</pallas_src>

<mosaic_0001>
module attributes {stable_mosaic.version = 11 : i64} {
  func.func @text_embedding_kernel(%arg0: i32, %arg1: memref<1xi32, #tpu.memory_space<smem>>, %arg2: memref<2x16x1xi32, #tpu.memory_space<vmem>>, %arg3: memref<256x32xbf16, #tpu.memory_space<vmem>>, %arg4: memref<16x32xf32, #tpu.memory_space<vmem>>, %arg5: memref<2x7x32xf32, #tpu.memory_space<vmem>>, %arg6: memref<2x1x32xf32, #tpu.memory_space<vmem>>, %arg7: memref<2x1x32xf32, #tpu.memory_space<vmem>>, %arg8: memref<2x1x32xf32, #tpu.memory_space<vmem>>, %arg9: memref<2x32x64xbf16, #tpu.memory_space<vmem>>, %arg10: memref<2x1x64xf32, #tpu.memory_space<vmem>>, %arg11: memref<2x1x64xf32, #tpu.memory_space<vmem>>, %arg12: memref<2x1x64xf32, #tpu.memory_space<vmem>>, %arg13: memref<2x64x32xbf16, #tpu.memory_space<vmem>>, %arg14: memref<2x1x32xf32, #tpu.memory_space<vmem>>, %arg15: memref<2x16x32xf32, #tpu.memory_space<vmem>>) attributes {dimension_semantics = [#tpu.dimension_semantics<parallel>], iteration_bounds = array<i64: 1>, scalar_prefetch = 1 : i64, scratch_operands = 0 : i64, tpu.core_type = #tpu.core_type<tc>, window_params = [{transform_indices = @transform_0, window_bounds = array<i64: 2, 16, 1>}, {pipeline_mode = #tpu.pipeline_mode<synchronous>, transform_indices = @transform_1, window_bounds = array<i64: 256, 32>}, {pipeline_mode = #tpu.pipeline_mode<synchronous>, transform_indices = @transform_2, window_bounds = array<i64: 16, 32>}, {pipeline_mode = #tpu.pipeline_mode<synchronous>, transform_indices = @transform_3, window_bounds = array<i64: 2, 7, 32>}, {pipeline_mode = #tpu.pipeline_mode<synchronous>, transform_indices = @transform_4, window_bounds = array<i64: 2, 1, 32>}, {pipeline_mode = #tpu.pipeline_mode<synchronous>, transform_indices = @transform_5, window_bounds = array<i64: 2, 1, 32>}, {pipeline_mode = #tpu.pipeline_mode<synchronous>, transform_indices = @transform_6, window_bounds = array<i64: 2, 1, 32>}, {pipeline_mode = #tpu.pipeline_mode<synchronous>, transform_indices = @transform_7, window_bounds = array<i64: 2, 32, 64>}, {pipeline_mode = #tpu.pipeline_mode<synchronous>, transform_indices = @transform_8, window_bounds = array<i64: 2, 1, 64>}, {pipeline_mode = #tpu.pipeline_mode<synchronous>, transform_indices = @transform_9, window_bounds = array<i64: 2, 1, 64>}, {pipeline_mode = #tpu.pipeline_mode<synchronous>, transform_indices = @transform_10, window_bounds = array<i64: 2, 1, 64>}, {pipeline_mode = #tpu.pipeline_mode<synchronous>, transform_indices = @transform_11, window_bounds = array<i64: 2, 64, 32>}, {pipeline_mode = #tpu.pipeline_mode<synchronous>, transform_indices = @transform_12, window_bounds = array<i64: 2, 1, 32>}, {transform_indices = @transform_13, window_bounds = array<i64: 2, 16, 32>}]} {
    %c0 = arith.constant 0 : index
    %0 = memref.load %arg1[%c0] : memref<1xi32, #tpu.memory_space<smem>>
    %1 = tpu.iota {dimensions = array<i32: 0>} : vector<16x1xi32>
    %2 = tpu.concatenate %1, %1 in 0 : vector<16x1xi32>, vector<16x1xi32> -> vector<32x1xi32>
    %3 = vector.broadcast %0 : i32 to vector<32x1xi32>
    %4 = arith.cmpi slt, %2, %3 : vector<32x1xi32>
    %c-3_i32 = arith.constant -3 : i32
    %5 = vector.broadcast %c-3_i32 : i32 to vector<32x1xi32>
    %6 = arith.addi %2, %5 : vector<32x1xi32>
    %c0_i32 = arith.constant 0 : i32
    %7 = vector.broadcast %c0_i32 : i32 to vector<32x1xi32>
    %8 = arith.cmpi sge, %6, %7 : vector<32x1xi32>
    %c-3_i32_0 = arith.constant -3 : i32
    %9 = vector.broadcast %c-3_i32_0 : i32 to vector<32x1xi32>
    %10 = arith.addi %2, %9 : vector<32x1xi32>
    %c16_i32 = arith.constant 16 : i32
    %11 = vector.broadcast %c16_i32 : i32 to vector<32x1xi32>
    %12 = arith.cmpi slt, %10, %11 : vector<32x1xi32>
    %13 = arith.andi %8, %12 : vector<32x1xi1>
    %c-2_i32 = arith.constant -2 : i32
    %14 = vector.broadcast %c-2_i32 : i32 to vector<32x1xi32>
    %15 = arith.addi %2, %14 : vector<32x1xi32>
    %c0_i32_1 = arith.constant 0 : i32
    %16 = vector.broadcast %c0_i32_1 : i32 to vector<32x1xi32>
    %17 = arith.cmpi sge, %15, %16 : vector<32x1xi32>
    %c-2_i32_2 = arith.constant -2 : i32
    %18 = vector.broadcast %c-2_i32_2 : i32 to vector<32x1xi32>
    %19 = arith.addi %2, %18 : vector<32x1xi32>
    %c16_i32_3 = arith.constant 16 : i32
    %20 = vector.broadcast %c16_i32_3 : i32 to vector<32x1xi32>
    %21 = arith.cmpi slt, %19, %20 : vector<32x1xi32>
    %22 = arith.andi %17, %21 : vector<32x1xi1>
    %c-1_i32 = arith.constant -1 : i32
    %23 = vector.broadcast %c-1_i32 : i32 to vector<32x1xi32>
    %24 = arith.addi %2, %23 : vector<32x1xi32>
    %c0_i32_4 = arith.constant 0 : i32
    %25 = vector.broadcast %c0_i32_4 : i32 to vector<32x1xi32>
    %26 = arith.cmpi sge, %24, %25 : vector<32x1xi32>
    %c-1_i32_5 = arith.constant -1 : i32
    %27 = vector.broadcast %c-1_i32_5 : i32 to vector<32x1xi32>
    %28 = arith.addi %2, %27 : vector<32x1xi32>
    %c16_i32_6 = arith.constant 16 : i32
    %29 = vector.broadcast %c16_i32_6 : i32 to vector<32x1xi32>
    %30 = arith.cmpi slt, %28, %29 : vector<32x1xi32>
    %31 = arith.andi %26, %30 : vector<32x1xi1>
    %c0_i32_7 = arith.constant 0 : i32
    %32 = vector.broadcast %c0_i32_7 : i32 to vector<32x1xi32>
    %33 = arith.addi %2, %32 : vector<32x1xi32>
    %c0_i32_8 = arith.constant 0 : i32
    %34 = vector.broadcast %c0_i32_8 : i32 to vector<32x1xi32>
    %35 = arith.cmpi sge, %33, %34 : vector<32x1xi32>
    %c0_i32_9 = arith.constant 0 : i32
    %36 = vector.broadcast %c0_i32_9 : i32 to vector<32x1xi32>
    %37 = arith.addi %2, %36 : vector<32x1xi32>
    %c16_i32_10 = arith.constant 16 : i32
    %38 = vector.broadcast %c16_i32_10 : i32 to vector<32x1xi32>
    %39 = arith.cmpi slt, %37, %38 : vector<32x1xi32>
    %40 = arith.andi %35, %39 : vector<32x1xi1>
    %c1_i32 = arith.constant 1 : i32
    %41 = vector.broadcast %c1_i32 : i32 to vector<32x1xi32>
    %42 = arith.addi %2, %41 : vector<32x1xi32>
    %c0_i32_11 = arith.constant 0 : i32
    %43 = vector.broadcast %c0_i32_11 : i32 to vector<32x1xi32>
    %44 = arith.cmpi sge, %42, %43 : vector<32x1xi32>
    %c1_i32_12 = arith.constant 1 : i32
    %45 = vector.broadcast %c1_i32_12 : i32 to vector<32x1xi32>
    %46 = arith.addi %2, %45 : vector<32x1xi32>
    %c16_i32_13 = arith.constant 16 : i32
    %47 = vector.broadcast %c16_i32_13 : i32 to vector<32x1xi32>
    %48 = arith.cmpi slt, %46, %47 : vector<32x1xi32>
    %49 = arith.andi %44, %48 : vector<32x1xi1>
    %c2_i32 = arith.constant 2 : i32
    %50 = vector.broadcast %c2_i32 : i32 to vector<32x1xi32>
    %51 = arith.addi %2, %50 : vector<32x1xi32>
    %c0_i32_14 = arith.constant 0 : i32
    %52 = vector.broadcast %c0_i32_14 : i32 to vector<32x1xi32>
    %53 = arith.cmpi sge, %51, %52 : vector<32x1xi32>
    %c2_i32_15 = arith.constant 2 : i32
    %54 = vector.broadcast %c2_i32_15 : i32 to vector<32x1xi32>
    %55 = arith.addi %2, %54 : vector<32x1xi32>
    %c16_i32_16 = arith.constant 16 : i32
    %56 = vector.broadcast %c16_i32_16 : i32 to vector<32x1xi32>
    %57 = arith.cmpi slt, %55, %56 : vector<32x1xi32>
    %58 = arith.andi %53, %57 : vector<32x1xi1>
    %c3_i32 = arith.constant 3 : i32
    %59 = vector.broadcast %c3_i32 : i32 to vector<32x1xi32>
    %60 = arith.addi %2, %59 : vector<32x1xi32>
    %c0_i32_17 = arith.constant 0 : i32
    %61 = vector.broadcast %c0_i32_17 : i32 to vector<32x1xi32>
    %62 = arith.cmpi sge, %60, %61 : vector<32x1xi32>
    %c3_i32_18 = arith.constant 3 : i32
    %63 = vector.broadcast %c3_i32_18 : i32 to vector<32x1xi32>
    %64 = arith.addi %2, %63 : vector<32x1xi32>
    %c16_i32_19 = arith.constant 16 : i32
    %65 = vector.broadcast %c16_i32_19 : i32 to vector<32x1xi32>
    %66 = arith.cmpi slt, %64, %65 : vector<32x1xi32>
    %67 = arith.andi %62, %66 : vector<32x1xi1>
    %68 = tpu.iota {dimensions = array<i32: 0>} : vector<8x32xi32>
    %69 = tpu.iota {dimensions = array<i32: 1>} : vector<8x32xi32>
    %c16_i32_20 = arith.constant 16 : i32
    %70 = vector.broadcast %c16_i32_20 : i32 to vector<8x32xi32>
    %71 = arith.muli %68, %70 : vector<8x32xi32>
    %72 = arith.cmpi sge, %69, %71 : vector<8x32xi32>
    %c16_i32_21 = arith.constant 16 : i32
    %73 = vector.broadcast %c16_i32_21 : i32 to vector<8x32xi32>
    %74 = arith.addi %71, %73 : vector<8x32xi32>
    %75 = arith.cmpi slt, %69, %74 : vector<8x32xi32>
    %76 = arith.andi %72, %75 : vector<8x32xi1>
    %77 = arith.extui %76 : vector<8x32xi1> to vector<8x32xi32>
    %78 = arith.sitofp %77 : vector<8x32xi32> to vector<8x32xf32>
    %79 = arith.truncf %78 : vector<8x32xf32> to vector<8x32xbf16>
    %c0_22 = arith.constant 0 : index
    %c0_23 = arith.constant 0 : index
    %c0_24 = arith.constant 0 : index
    %80 = vector.load %arg2[%c0_22, %c0_23, %c0_24] : memref<2x16x1xi32, #tpu.memory_space<vmem>>, vector<1x16x1xi32>
    %81 = vector.shape_cast %80 : vector<1x16x1xi32> to vector<16x1xi32>
    %c1 = arith.constant 1 : index
    %c0_25 = arith.constant 0 : index
    %c0_26 = arith.constant 0 : index
    %82 = vector.load %arg2[%c1, %c0_25, %c0_26] : memref<2x16x1xi32, #tpu.memory_space<vmem>>, vector<1x16x1xi32>
    %83 = vector.shape_cast %82 : vector<1x16x1xi32> to vector<16x1xi32>
    %84 = tpu.concatenate %81, %83 in 0 : vector<16x1xi32>, vector<16x1xi32> -> vector<32x1xi32>
    %c0_i32_27 = arith.constant 0 : i32
    %85 = vector.broadcast %c0_i32_27 : i32 to vector<32x1xi32>
    %86 = arith.maxsi %84, %85 : vector<32x1xi32>
    %87 = tpu.iota {dimensions = array<i32: 1>} : vector<32x256xi32>
    %c0_i32_28 = arith.constant 0 : i32
    %88 = vector.broadcast %c0_i32_28 : i32 to vector<32x1xi32>
    %89 = arith.subi %86, %88 : vector<32x1xi32>
    %90 = vector.broadcast %89 : vector<32x1xi32> to vector<32x256xi32>
    %91 = arith.cmpi eq, %90, %87 : vector<32x256xi32>
    %92 = arith.extui %91 : vector<32x256xi1> to vector<32x256xi32>
    %93 = arith.sitofp %92 : vector<32x256xi32> to vector<32x256xf32>
    %94 = arith.truncf %93 : vector<32x256xf32> to vector<32x256xbf16>
    %c0_29 = arith.constant 0 : index
    %c0_30 = arith.constant 0 : index
    %95 = vector.load %arg3[%c0_29, %c0_30] : memref<256x32xbf16, #tpu.memory_space<vmem>>, vector<256x32xbf16>
    %cst = arith.constant dense<0.000000e+00> : vector<32x32xf32>
    %96 = tpu.matmul %94, %95, %cst {dimension_numbers = #tpu.dot_dimension_numbers<[1], [0], [0], [1], [0, 0, 1, 1], [], []>} : vector<32x256xbf16>, vector<256x32xbf16>, vector<32x32xf32> -> vector<32x32xf32>
    %c0_31 = arith.constant 0 : index
    %c0_32 = arith.constant 0 : index
    %97 = vector.load %arg4[%c0_31, %c0_32] : memref<16x32xf32, #tpu.memory_space<vmem>>, vector<16x32xf32>
    %98 = tpu.concatenate %97, %97 in 0 : vector<16x32xf32>, vector<16x32xf32> -> vector<32x32xf32>
    %99 = arith.addf %96, %98 : vector<32x32xf32>
    %cst_33 = arith.constant 0.000000e+00 : f32
    %100 = vector.shape_cast %4 : vector<32x1xi1> to vector<32x1xi1>
    %101 = vector.broadcast %100 : vector<32x1xi1> to vector<32x32xi1>
    %102 = vector.broadcast %cst_33 : f32 to vector<32x32xf32>
    %103 = arith.select %101, %99, %102 : vector<32x32xi1>, vector<32x32xf32>
    %c0_34 = arith.constant 0 : index
    %c0_35 = arith.constant 0 : index
    %c0_36 = arith.constant 0 : index
    %104 = vector.load %arg5[%c0_34, %c0_35, %c0_36] : memref<2x7x32xf32, #tpu.memory_space<vmem>>, vector<1x7x32xf32>
    %105 = vector.shape_cast %104 : vector<1x7x32xf32> to vector<7x32xf32>
    %cst_37 = arith.constant 0.000000e+00 : f32
    %106 = vector.broadcast %cst_37 : f32 to vector<32x32xf32>
    %c3_i32_38 = arith.constant 3 : i32
    %107 = tpu.dynamic_rotate %103 by %c3_i32_38 dim 0 : vector<32x32xf32>, i32 -> vector<32x32xf32>
    %cst_39 = arith.constant 0.000000e+00 : f32
    %108 = vector.shape_cast %13 : vector<32x1xi1> to vector<32x1xi1>
    %109 = vector.broadcast %108 : vector<32x1xi1> to vector<32x32xi1>
    %110 = vector.broadcast %cst_39 : f32 to vector<32x32xf32>
    %111 = arith.select %109, %107, %110 : vector<32x32xi1>, vector<32x32xf32>
    %112 = vector.extract_strided_slice %105 {offsets = [0, 0], sizes = [1, 32], strides = [1, 1]} : vector<7x32xf32> to vector<1x32xf32>
    %113 = vector.broadcast %112 : vector<1x32xf32> to vector<32x32xf32>
    %114 = arith.mulf %111, %113 : vector<32x32xf32>
    %115 = arith.addf %106, %114 : vector<32x32xf32>
    %c2_i32_40 = arith.constant 2 : i32
    %116 = tpu.dynamic_rotate %103 by %c2_i32_40 dim 0 : vector<32x32xf32>, i32 -> vector<32x32xf32>
    %cst_41 = arith.constant 0.000000e+00 : f32
    %117 = vector.shape_cast %22 : vector<32x1xi1> to vector<32x1xi1>
    %118 = vector.broadcast %117 : vector<32x1xi1> to vector<32x32xi1>
    %119 = vector.broadcast %cst_41 : f32 to vector<32x32xf32>
    %120 = arith.select %118, %116, %119 : vector<32x32xi1>, vector<32x32xf32>
    %121 = vector.extract_strided_slice %105 {offsets = [1, 0], sizes = [1, 32], strides = [1, 1]} : vector<7x32xf32> to vector<1x32xf32>
    %122 = vector.broadcast %121 : vector<1x32xf32> to vector<32x32xf32>
    %123 = arith.mulf %120, %122 : vector<32x32xf32>
    %124 = arith.addf %115, %123 : vector<32x32xf32>
    %c1_i32_42 = arith.constant 1 : i32
    %125 = tpu.dynamic_rotate %103 by %c1_i32_42 dim 0 : vector<32x32xf32>, i32 -> vector<32x32xf32>
    %cst_43 = arith.constant 0.000000e+00 : f32
    %126 = vector.shape_cast %31 : vector<32x1xi1> to vector<32x1xi1>
    %127 = vector.broadcast %126 : vector<32x1xi1> to vector<32x32xi1>
    %128 = vector.broadcast %cst_43 : f32 to vector<32x32xf32>
    %129 = arith.select %127, %125, %128 : vector<32x32xi1>, vector<32x32xf32>
    %130 = vector.extract_strided_slice %105 {offsets = [2, 0], sizes = [1, 32], strides = [1, 1]} : vector<7x32xf32> to vector<1x32xf32>
    %131 = vector.broadcast %130 : vector<1x32xf32> to vector<32x32xf32>
    %132 = arith.mulf %129, %131 : vector<32x32xf32>
    %133 = arith.addf %124, %132 : vector<32x32xf32>
    %cst_44 = arith.constant 0.000000e+00 : f32
    %134 = vector.shape_cast %40 : vector<32x1xi1> to vector<32x1xi1>
    %135 = vector.broadcast %134 : vector<32x1xi1> to vector<32x32xi1>
    %136 = vector.broadcast %cst_44 : f32 to vector<32x32xf32>
    %137 = arith.select %135, %103, %136 : vector<32x32xi1>, vector<32x32xf32>
    %138 = vector.extract_strided_slice %105 {offsets = [3, 0], sizes = [1, 32], strides = [1, 1]} : vector<7x32xf32> to vector<1x32xf32>
    %139 = vector.broadcast %138 : vector<1x32xf32> to vector<32x32xf32>
    %140 = arith.mulf %137, %139 : vector<32x32xf32>
    %141 = arith.addf %133, %140 : vector<32x32xf32>
    %c31_i32 = arith.constant 31 : i32
    %142 = tpu.dynamic_rotate %103 by %c31_i32 dim 0 : vector<32x32xf32>, i32 -> vector<32x32xf32>
    %cst_45 = arith.constant 0.000000e+00 : f32
    %143 = vector.shape_cast %49 : vector<32x1xi1> to vector<32x1xi1>
    %144 = vector.broadcast %143 : vector<32x1xi1> to vector<32x32xi1>
    %145 = vector.broadcast %cst_45 : f32 to vector<32x32xf32>
    %146 = arith.select %144, %142, %145 : vector<32x32xi1>, vector<32x32xf32>
    %147 = vector.extract_strided_slice %105 {offsets = [4, 0], sizes = [1, 32], strides = [1, 1]} : vector<7x32xf32> to vector<1x32xf32>
    %148 = vector.broadcast %147 : vector<1x32xf32> to vector<32x32xf32>
    %149 = arith.mulf %146, %148 : vector<32x32xf32>
    %150 = arith.addf %141, %149 : vector<32x32xf32>
    %c30_i32 = arith.constant 30 : i32
    %151 = tpu.dynamic_rotate %103 by %c30_i32 dim 0 : vector<32x32xf32>, i32 -> vector<32x32xf32>
    %cst_46 = arith.constant 0.000000e+00 : f32
    %152 = vector.shape_cast %58 : vector<32x1xi1> to vector<32x1xi1>
    %153 = vector.broadcast %152 : vector<32x1xi1> to vector<32x32xi1>
    %154 = vector.broadcast %cst_46 : f32 to vector<32x32xf32>
    %155 = arith.select %153, %151, %154 : vector<32x32xi1>, vector<32x32xf32>
    %156 = vector.extract_strided_slice %105 {offsets = [5, 0], sizes = [1, 32], strides = [1, 1]} : vector<7x32xf32> to vector<1x32xf32>
    %157 = vector.broadcast %156 : vector<1x32xf32> to vector<32x32xf32>
    %158 = arith.mulf %155, %157 : vector<32x32xf32>
    %159 = arith.addf %150, %158 : vector<32x32xf32>
    %c29_i32 = arith.constant 29 : i32
    %160 = tpu.dynamic_rotate %103 by %c29_i32 dim 0 : vector<32x32xf32>, i32 -> vector<32x32xf32>
    %cst_47 = arith.constant 0.000000e+00 : f32
    %161 = vector.shape_cast %67 : vector<32x1xi1> to vector<32x1xi1>
    %162 = vector.broadcast %161 : vector<32x1xi1> to vector<32x32xi1>
    %163 = vector.broadcast %cst_47 : f32 to vector<32x32xf32>
    %164 = arith.select %162, %160, %163 : vector<32x32xi1>, vector<32x32xf32>
    %165 = vector.extract_strided_slice %105 {offsets = [6, 0], sizes = [1, 32], strides = [1, 1]} : vector<7x32xf32> to vector<1x32xf32>
    %166 = vector.broadcast %165 : vector<1x32xf32> to vector<32x32xf32>
    %167 = arith.mulf %164, %166 : vector<32x32xf32>
    %168 = arith.addf %159, %167 : vector<32x32xf32>
    %c0_48 = arith.constant 0 : index
    %c0_49 = arith.constant 0 : index
    %c0_50 = arith.constant 0 : index
    %169 = vector.load %arg6[%c0_48, %c0_49, %c0_50] : memref<2x1x32xf32, #tpu.memory_space<vmem>>, vector<1x1x32xf32>
    %170 = vector.shape_cast %169 : vector<1x1x32xf32> to vector<1x32xf32>
    %171 = vector.broadcast %170 : vector<1x32xf32> to vector<32x32xf32>
    %172 = arith.addf %168, %171 : vector<32x32xf32>
    %cst_51 = arith.constant dense<0.000000e+00> : vector<32xf32>
    %173 = vector.multi_reduction <add>, %172, %cst_51 [1] : vector<32x32xf32> to vector<32xf32>
    %174 = vector.shape_cast %173 : vector<32xf32> to vector<32x1xf32>
    %cst_52 = arith.constant 3.200000e+01 : f32
    %175 = vector.broadcast %cst_52 : f32 to vector<32x1xf32>
    %176 = arith.divf %174, %175 : vector<32x1xf32>
    %177 = arith.mulf %172, %172 : vector<32x32xf32>
    %cst_53 = arith.constant dense<0.000000e+00> : vector<32xf32>
    %178 = vector.multi_reduction <add>, %177, %cst_53 [1] : vector<32x32xf32> to vector<32xf32>
    %179 = vector.shape_cast %178 : vector<32xf32> to vector<32x1xf32>
    %cst_54 = arith.constant 3.200000e+01 : f32
    %180 = vector.broadcast %cst_54 : f32 to vector<32x1xf32>
    %181 = arith.divf %179, %180 : vector<32x1xf32>
    %182 = arith.mulf %176, %176 : vector<32x1xf32>
    %183 = arith.subf %181, %182 : vector<32x1xf32>
    %184 = vector.broadcast %176 : vector<32x1xf32> to vector<32x32xf32>
    %185 = arith.subf %172, %184 : vector<32x32xf32>
    %cst_55 = arith.constant 9.99999997E-7 : f32
    %186 = vector.broadcast %cst_55 : f32 to vector<32x1xf32>
    %187 = arith.addf %183, %186 : vector<32x1xf32>
    %188 = math.rsqrt %187 : vector<32x1xf32>
    %189 = vector.broadcast %188 : vector<32x1xf32> to vector<32x32xf32>
    %190 = arith.mulf %185, %189 : vector<32x32xf32>
    %c0_56 = arith.constant 0 : index
    %c0_57 = arith.constant 0 : index
    %c0_58 = arith.constant 0 : index
    %191 = vector.load %arg7[%c0_56, %c0_57, %c0_58] : memref<2x1x32xf32, #tpu.memory_space<vmem>>, vector<1x1x32xf32>
    %192 = vector.shape_cast %191 : vector<1x1x32xf32> to vector<1x32xf32>
    %193 = vector.broadcast %192 : vector<1x32xf32> to vector<32x32xf32>
    %194 = arith.mulf %190, %193 : vector<32x32xf32>
    %c0_59 = arith.constant 0 : index
    %c0_60 = arith.constant 0 : index
    %c0_61 = arith.constant 0 : index
    %195 = vector.load %arg8[%c0_59, %c0_60, %c0_61] : memref<2x1x32xf32, #tpu.memory_space<vmem>>, vector<1x1x32xf32>
    %196 = vector.shape_cast %195 : vector<1x1x32xf32> to vector<1x32xf32>
    %197 = vector.broadcast %196 : vector<1x32xf32> to vector<32x32xf32>
    %198 = arith.addf %194, %197 : vector<32x32xf32>
    %199 = arith.truncf %198 : vector<32x32xf32> to vector<32x32xbf16>
    %c0_62 = arith.constant 0 : index
    %c0_63 = arith.constant 0 : index
    %c0_64 = arith.constant 0 : index
    %200 = vector.load %arg9[%c0_62, %c0_63, %c0_64] : memref<2x32x64xbf16, #tpu.memory_space<vmem>>, vector<1x32x64xbf16>
    %201 = vector.shape_cast %200 : vector<1x32x64xbf16> to vector<32x64xbf16>
    %cst_65 = arith.constant dense<0.000000e+00> : vector<32x64xf32>
    %202 = tpu.matmul %199, %201, %cst_65 {dimension_numbers = #tpu.dot_dimension_numbers<[1], [0], [0], [1], [0, 0, 1, 1], [], []>} : vector<32x32xbf16>, vector<32x64xbf16>, vector<32x64xf32> -> vector<32x64xf32>
    %c0_66 = arith.constant 0 : index
    %c0_67 = arith.constant 0 : index
    %c0_68 = arith.constant 0 : index
    %203 = vector.load %arg10[%c0_66, %c0_67, %c0_68] : memref<2x1x64xf32, #tpu.memory_space<vmem>>, vector<1x1x64xf32>
    %204 = vector.shape_cast %203 : vector<1x1x64xf32> to vector<1x64xf32>
    %205 = vector.broadcast %204 : vector<1x64xf32> to vector<32x64xf32>
    %206 = arith.addf %202, %205 : vector<32x64xf32>
    %cst_69 = arith.constant 5.000000e-01 : f32
    %207 = vector.broadcast %cst_69 : f32 to vector<32x64xf32>
    %208 = arith.mulf %207, %206 : vector<32x64xf32>
    %cst_70 = arith.constant 4.471500e-02 : f32
    %209 = vector.broadcast %cst_70 : f32 to vector<32x64xf32>
    %210 = arith.mulf %209, %206 : vector<32x64xf32>
    %211 = arith.mulf %210, %206 : vector<32x64xf32>
    %212 = arith.mulf %211, %206 : vector<32x64xf32>
    %213 = arith.addf %206, %212 : vector<32x64xf32>
    %cst_71 = arith.constant 0.797884583 : f32
    %214 = vector.broadcast %cst_71 : f32 to vector<32x64xf32>
    %215 = arith.mulf %214, %213 : vector<32x64xf32>
    %216 = math.tanh %215 : vector<32x64xf32>
    %cst_72 = arith.constant 1.000000e+00 : f32
    %217 = vector.broadcast %cst_72 : f32 to vector<32x64xf32>
    %218 = arith.addf %217, %216 : vector<32x64xf32>
    %219 = arith.mulf %208, %218 : vector<32x64xf32>
    %cst_73 = arith.constant 0.000000e+00 : f32
    %220 = vector.shape_cast %4 : vector<32x1xi1> to vector<32x1xi1>
    %221 = vector.broadcast %220 : vector<32x1xi1> to vector<32x64xi1>
    %222 = vector.broadcast %cst_73 : f32 to vector<32x64xf32>
    %223 = arith.select %221, %219, %222 : vector<32x64xi1>, vector<32x64xf32>
    %224 = arith.mulf %223, %223 : vector<32x64xf32>
    %225 = arith.truncf %224 : vector<32x64xf32> to vector<32x64xbf16>
    %cst_74 = arith.constant dense<0.000000e+00> : vector<8x64xf32>
    %226 = tpu.matmul %79, %225, %cst_74 {dimension_numbers = #tpu.dot_dimension_numbers<[1], [0], [0], [1], [0, 0, 1, 1], [], []>} : vector<8x32xbf16>, vector<32x64xbf16>, vector<8x64xf32> -> vector<8x64xf32>
    %227 = math.sqrt %226 : vector<8x64xf32>
    %cst_75 = arith.constant dense<0.000000e+00> : vector<8xf32>
    %228 = vector.multi_reduction <add>, %227, %cst_75 [1] : vector<8x64xf32> to vector<8xf32>
    %229 = vector.shape_cast %228 : vector<8xf32> to vector<8x1xf32>
    %cst_76 = arith.constant 6.400000e+01 : f32
    %230 = vector.broadcast %cst_76 : f32 to vector<8x1xf32>
    %231 = arith.divf %229, %230 : vector<8x1xf32>
    %cst_77 = arith.constant 9.99999997E-7 : f32
    %232 = vector.broadcast %cst_77 : f32 to vector<8x1xf32>
    %233 = arith.addf %231, %232 : vector<8x1xf32>
    %234 = tpu.reciprocal %233 {approx = true} : vector<8x1xf32> -> vector<8x1xf32>
    %235 = vector.broadcast %234 : vector<8x1xf32> to vector<8x64xf32>
    %236 = arith.mulf %227, %235 : vector<8x64xf32>
    %237 = vector.extract_strided_slice %236 {offsets = [0, 0], sizes = [1, 64], strides = [1, 1]} : vector<8x64xf32> to vector<1x64xf32>
    %238 = vector.shape_cast %237 : vector<1x64xf32> to vector<1x64xf32>
    %239 = vector.broadcast %238 : vector<1x64xf32> to vector<16x64xf32>
    %240 = vector.extract_strided_slice %236 {offsets = [1, 0], sizes = [1, 64], strides = [1, 1]} : vector<8x64xf32> to vector<1x64xf32>
    %241 = vector.shape_cast %240 : vector<1x64xf32> to vector<1x64xf32>
    %242 = vector.broadcast %241 : vector<1x64xf32> to vector<16x64xf32>
    %243 = tpu.concatenate %239, %242 in 0 : vector<16x64xf32>, vector<16x64xf32> -> vector<32x64xf32>
    %c0_78 = arith.constant 0 : index
    %c0_79 = arith.constant 0 : index
    %c0_80 = arith.constant 0 : index
    %244 = vector.load %arg11[%c0_78, %c0_79, %c0_80] : memref<2x1x64xf32, #tpu.memory_space<vmem>>, vector<1x1x64xf32>
    %245 = vector.shape_cast %244 : vector<1x1x64xf32> to vector<1x64xf32>
    %246 = arith.mulf %223, %243 : vector<32x64xf32>
    %247 = vector.broadcast %245 : vector<1x64xf32> to vector<32x64xf32>
    %248 = arith.mulf %247, %246 : vector<32x64xf32>
    %c0_81 = arith.constant 0 : index
    %c0_82 = arith.constant 0 : index
    %c0_83 = arith.constant 0 : index
    %249 = vector.load %arg12[%c0_81, %c0_82, %c0_83] : memref<2x1x64xf32, #tpu.memory_space<vmem>>, vector<1x1x64xf32>
    %250 = vector.shape_cast %249 : vector<1x1x64xf32> to vector<1x64xf32>
    %251 = vector.broadcast %250 : vector<1x64xf32> to vector<32x64xf32>
    %252 = arith.addf %248, %251 : vector<32x64xf32>
    %253 = arith.addf %252, %223 : vector<32x64xf32>
    %254 = arith.truncf %253 : vector<32x64xf32> to vector<32x64xbf16>
    %c0_84 = arith.constant 0 : index
    %c0_85 = arith.constant 0 : index
    %c0_86 = arith.constant 0 : index
    %255 = vector.load %arg13[%c0_84, %c0_85, %c0_86] : memref<2x64x32xbf16, #tpu.memory_space<vmem>>, vector<1x64x32xbf16>
    %256 = vector.shape_cast %255 : vector<1x64x32xbf16> to vector<64x32xbf16>
    %cst_87 = arith.constant dense<0.000000e+00> : vector<32x32xf32>
    %257 = tpu.matmul %254, %256, %cst_87 {dimension_numbers = #tpu.dot_dimension_numbers<[1], [0], [0], [1], [0, 0, 1, 1], [], []>} : vector<32x64xbf16>, vector<64x32xbf16>, vector<32x32xf32> -> vector<32x32xf32>
    %258 = arith.addf %103, %257 : vector<32x32xf32>
    %c0_88 = arith.constant 0 : index
    %c0_89 = arith.constant 0 : index
    %c0_90 = arith.constant 0 : index
    %259 = vector.load %arg14[%c0_88, %c0_89, %c0_90] : memref<2x1x32xf32, #tpu.memory_space<vmem>>, vector<1x1x32xf32>
    %260 = vector.shape_cast %259 : vector<1x1x32xf32> to vector<1x32xf32>
    %261 = vector.broadcast %260 : vector<1x32xf32> to vector<32x32xf32>
    %262 = arith.addf %258, %261 : vector<32x32xf32>
    %cst_91 = arith.constant 0.000000e+00 : f32
    %263 = vector.shape_cast %4 : vector<32x1xi1> to vector<32x1xi1>
    %264 = vector.broadcast %263 : vector<32x1xi1> to vector<32x32xi1>
    %265 = vector.broadcast %cst_91 : f32 to vector<32x32xf32>
    %266 = arith.select %264, %262, %265 : vector<32x32xi1>, vector<32x32xf32>
    %c1_92 = arith.constant 1 : index
    %c0_93 = arith.constant 0 : index
    %c0_94 = arith.constant 0 : index
    %267 = vector.load %arg5[%c1_92, %c0_93, %c0_94] : memref<2x7x32xf32, #tpu.memory_space<vmem>>, vector<1x7x32xf32>
    %268 = vector.shape_cast %267 : vector<1x7x32xf32> to vector<7x32xf32>
    %cst_95 = arith.constant 0.000000e+00 : f32
    %269 = vector.broadcast %cst_95 : f32 to vector<32x32xf32>
    %c3_i32_96 = arith.constant 3 : i32
    %270 = tpu.dynamic_rotate %266 by %c3_i32_96 dim 0 : vector<32x32xf32>, i32 -> vector<32x32xf32>
    %cst_97 = arith.constant 0.000000e+00 : f32
    %271 = vector.shape_cast %13 : vector<32x1xi1> to vector<32x1xi1>
    %272 = vector.broadcast %271 : vector<32x1xi1> to vector<32x32xi1>
    %273 = vector.broadcast %cst_97 : f32 to vector<32x32xf32>
    %274 = arith.select %272, %270, %273 : vector<32x32xi1>, vector<32x32xf32>
    %275 = vector.extract_strided_slice %268 {offsets = [0, 0], sizes = [1, 32], strides = [1, 1]} : vector<7x32xf32> to vector<1x32xf32>
    %276 = vector.broadcast %275 : vector<1x32xf32> to vector<32x32xf32>
    %277 = arith.mulf %274, %276 : vector<32x32xf32>
    %278 = arith.addf %269, %277 : vector<32x32xf32>
    %c2_i32_98 = arith.constant 2 : i32
    %279 = tpu.dynamic_rotate %266 by %c2_i32_98 dim 0 : vector<32x32xf32>, i32 -> vector<32x32xf32>
    %cst_99 = arith.constant 0.000000e+00 : f32
    %280 = vector.shape_cast %22 : vector<32x1xi1> to vector<32x1xi1>
    %281 = vector.broadcast %280 : vector<32x1xi1> to vector<32x32xi1>
    %282 = vector.broadcast %cst_99 : f32 to vector<32x32xf32>
    %283 = arith.select %281, %279, %282 : vector<32x32xi1>, vector<32x32xf32>
    %284 = vector.extract_strided_slice %268 {offsets = [1, 0], sizes = [1, 32], strides = [1, 1]} : vector<7x32xf32> to vector<1x32xf32>
    %285 = vector.broadcast %284 : vector<1x32xf32> to vector<32x32xf32>
    %286 = arith.mulf %283, %285 : vector<32x32xf32>
    %287 = arith.addf %278, %286 : vector<32x32xf32>
    %c1_i32_100 = arith.constant 1 : i32
    %288 = tpu.dynamic_rotate %266 by %c1_i32_100 dim 0 : vector<32x32xf32>, i32 -> vector<32x32xf32>
    %cst_101 = arith.constant 0.000000e+00 : f32
    %289 = vector.shape_cast %31 : vector<32x1xi1> to vector<32x1xi1>
    %290 = vector.broadcast %289 : vector<32x1xi1> to vector<32x32xi1>
    %291 = vector.broadcast %cst_101 : f32 to vector<32x32xf32>
    %292 = arith.select %290, %288, %291 : vector<32x32xi1>, vector<32x32xf32>
    %293 = vector.extract_strided_slice %268 {offsets = [2, 0], sizes = [1, 32], strides = [1, 1]} : vector<7x32xf32> to vector<1x32xf32>
    %294 = vector.broadcast %293 : vector<1x32xf32> to vector<32x32xf32>
    %295 = arith.mulf %292, %294 : vector<32x32xf32>
    %296 = arith.addf %287, %295 : vector<32x32xf32>
    %cst_102 = arith.constant 0.000000e+00 : f32
    %297 = vector.shape_cast %40 : vector<32x1xi1> to vector<32x1xi1>
    %298 = vector.broadcast %297 : vector<32x1xi1> to vector<32x32xi1>
    %299 = vector.broadcast %cst_102 : f32 to vector<32x32xf32>
    %300 = arith.select %298, %266, %299 : vector<32x32xi1>, vector<32x32xf32>
    %301 = vector.extract_strided_slice %268 {offsets = [3, 0], sizes = [1, 32], strides = [1, 1]} : vector<7x32xf32> to vector<1x32xf32>
    %302 = vector.broadcast %301 : vector<1x32xf32> to vector<32x32xf32>
    %303 = arith.mulf %300, %302 : vector<32x32xf32>
    %304 = arith.addf %296, %303 : vector<32x32xf32>
    %c31_i32_103 = arith.constant 31 : i32
    %305 = tpu.dynamic_rotate %266 by %c31_i32_103 dim 0 : vector<32x32xf32>, i32 -> vector<32x32xf32>
    %cst_104 = arith.constant 0.000000e+00 : f32
    %306 = vector.shape_cast %49 : vector<32x1xi1> to vector<32x1xi1>
    %307 = vector.broadcast %306 : vector<32x1xi1> to vector<32x32xi1>
    %308 = vector.broadcast %cst_104 : f32 to vector<32x32xf32>
    %309 = arith.select %307, %305, %308 : vector<32x32xi1>, vector<32x32xf32>
    %310 = vector.extract_strided_slice %268 {offsets = [4, 0], sizes = [1, 32], strides = [1, 1]} : vector<7x32xf32> to vector<1x32xf32>
    %311 = vector.broadcast %310 : vector<1x32xf32> to vector<32x32xf32>
    %312 = arith.mulf %309, %311 : vector<32x32xf32>
    %313 = arith.addf %304, %312 : vector<32x32xf32>
    %c30_i32_105 = arith.constant 30 : i32
    %314 = tpu.dynamic_rotate %266 by %c30_i32_105 dim 0 : vector<32x32xf32>, i32 -> vector<32x32xf32>
    %cst_106 = arith.constant 0.000000e+00 : f32
    %315 = vector.shape_cast %58 : vector<32x1xi1> to vector<32x1xi1>
    %316 = vector.broadcast %315 : vector<32x1xi1> to vector<32x32xi1>
    %317 = vector.broadcast %cst_106 : f32 to vector<32x32xf32>
    %318 = arith.select %316, %314, %317 : vector<32x32xi1>, vector<32x32xf32>
    %319 = vector.extract_strided_slice %268 {offsets = [5, 0], sizes = [1, 32], strides = [1, 1]} : vector<7x32xf32> to vector<1x32xf32>
    %320 = vector.broadcast %319 : vector<1x32xf32> to vector<32x32xf32>
    %321 = arith.mulf %318, %320 : vector<32x32xf32>
    %322 = arith.addf %313, %321 : vector<32x32xf32>
    %c29_i32_107 = arith.constant 29 : i32
    %323 = tpu.dynamic_rotate %266 by %c29_i32_107 dim 0 : vector<32x32xf32>, i32 -> vector<32x32xf32>
    %cst_108 = arith.constant 0.000000e+00 : f32
    %324 = vector.shape_cast %67 : vector<32x1xi1> to vector<32x1xi1>
    %325 = vector.broadcast %324 : vector<32x1xi1> to vector<32x32xi1>
    %326 = vector.broadcast %cst_108 : f32 to vector<32x32xf32>
    %327 = arith.select %325, %323, %326 : vector<32x32xi1>, vector<32x32xf32>
    %328 = vector.extract_strided_slice %268 {offsets = [6, 0], sizes = [1, 32], strides = [1, 1]} : vector<7x32xf32> to vector<1x32xf32>
    %329 = vector.broadcast %328 : vector<1x32xf32> to vector<32x32xf32>
    %330 = arith.mulf %327, %329 : vector<32x32xf32>
    %331 = arith.addf %322, %330 : vector<32x32xf32>
    %c1_109 = arith.constant 1 : index
    %c0_110 = arith.constant 0 : index
    %c0_111 = arith.constant 0 : index
    %332 = vector.load %arg6[%c1_109, %c0_110, %c0_111] : memref<2x1x32xf32, #tpu.memory_space<vmem>>, vector<1x1x32xf32>
    %333 = vector.shape_cast %332 : vector<1x1x32xf32> to vector<1x32xf32>
    %334 = vector.broadcast %333 : vector<1x32xf32> to vector<32x32xf32>
    %335 = arith.addf %331, %334 : vector<32x32xf32>
    %cst_112 = arith.constant dense<0.000000e+00> : vector<32xf32>
    %336 = vector.multi_reduction <add>, %335, %cst_112 [1] : vector<32x32xf32> to vector<32xf32>
    %337 = vector.shape_cast %336 : vector<32xf32> to vector<32x1xf32>
    %cst_113 = arith.constant 3.200000e+01 : f32
    %338 = vector.broadcast %cst_113 : f32 to vector<32x1xf32>
    %339 = arith.divf %337, %338 : vector<32x1xf32>
    %340 = arith.mulf %335, %335 : vector<32x32xf32>
    %cst_114 = arith.constant dense<0.000000e+00> : vector<32xf32>
    %341 = vector.multi_reduction <add>, %340, %cst_114 [1] : vector<32x32xf32> to vector<32xf32>
    %342 = vector.shape_cast %341 : vector<32xf32> to vector<32x1xf32>
    %cst_115 = arith.constant 3.200000e+01 : f32
    %343 = vector.broadcast %cst_115 : f32 to vector<32x1xf32>
    %344 = arith.divf %342, %343 : vector<32x1xf32>
    %345 = arith.mulf %339, %339 : vector<32x1xf32>
    %346 = arith.subf %344, %345 : vector<32x1xf32>
    %347 = vector.broadcast %339 : vector<32x1xf32> to vector<32x32xf32>
    %348 = arith.subf %335, %347 : vector<32x32xf32>
    %cst_116 = arith.constant 9.99999997E-7 : f32
    %349 = vector.broadcast %cst_116 : f32 to vector<32x1xf32>
    %350 = arith.addf %346, %349 : vector<32x1xf32>
    %351 = math.rsqrt %350 : vector<32x1xf32>
    %352 = vector.broadcast %351 : vector<32x1xf32> to vector<32x32xf32>
    %353 = arith.mulf %348, %352 : vector<32x32xf32>
    %c1_117 = arith.constant 1 : index
    %c0_118 = arith.constant 0 : index
    %c0_119 = arith.constant 0 : index
    %354 = vector.load %arg7[%c1_117, %c0_118, %c0_119] : memref<2x1x32xf32, #tpu.memory_space<vmem>>, vector<1x1x32xf32>
    %355 = vector.shape_cast %354 : vector<1x1x32xf32> to vector<1x32xf32>
    %356 = vector.broadcast %355 : vector<1x32xf32> to vector<32x32xf32>
    %357 = arith.mulf %353, %356 : vector<32x32xf32>
    %c1_120 = arith.constant 1 : index
    %c0_121 = arith.constant 0 : index
    %c0_122 = arith.constant 0 : index
    %358 = vector.load %arg8[%c1_120, %c0_121, %c0_122] : memref<2x1x32xf32, #tpu.memory_space<vmem>>, vector<1x1x32xf32>
    %359 = vector.shape_cast %358 : vector<1x1x32xf32> to vector<1x32xf32>
    %360 = vector.broadcast %359 : vector<1x32xf32> to vector<32x32xf32>
    %361 = arith.addf %357, %360 : vector<32x32xf32>
    %362 = arith.truncf %361 : vector<32x32xf32> to vector<32x32xbf16>
    %c1_123 = arith.constant 1 : index
    %c0_124 = arith.constant 0 : index
    %c0_125 = arith.constant 0 : index
    %363 = vector.load %arg9[%c1_123, %c0_124, %c0_125] : memref<2x32x64xbf16, #tpu.memory_space<vmem>>, vector<1x32x64xbf16>
    %364 = vector.shape_cast %363 : vector<1x32x64xbf16> to vector<32x64xbf16>
    %cst_126 = arith.constant dense<0.000000e+00> : vector<32x64xf32>
    %365 = tpu.matmul %362, %364, %cst_126 {dimension_numbers = #tpu.dot_dimension_numbers<[1], [0], [0], [1], [0, 0, 1, 1], [], []>} : vector<32x32xbf16>, vector<32x64xbf16>, vector<32x64xf32> -> vector<32x64xf32>
    %c1_127 = arith.constant 1 : index
    %c0_128 = arith.constant 0 : index
    %c0_129 = arith.constant 0 : index
    %366 = vector.load %arg10[%c1_127, %c0_128, %c0_129] : memref<2x1x64xf32, #tpu.memory_space<vmem>>, vector<1x1x64xf32>
    %367 = vector.shape_cast %366 : vector<1x1x64xf32> to vector<1x64xf32>
    %368 = vector.broadcast %367 : vector<1x64xf32> to vector<32x64xf32>
    %369 = arith.addf %365, %368 : vector<32x64xf32>
    %cst_130 = arith.constant 5.000000e-01 : f32
    %370 = vector.broadcast %cst_130 : f32 to vector<32x64xf32>
    %371 = arith.mulf %370, %369 : vector<32x64xf32>
    %cst_131 = arith.constant 4.471500e-02 : f32
    %372 = vector.broadcast %cst_131 : f32 to vector<32x64xf32>
    %373 = arith.mulf %372, %369 : vector<32x64xf32>
    %374 = arith.mulf %373, %369 : vector<32x64xf32>
    %375 = arith.mulf %374, %369 : vector<32x64xf32>
    %376 = arith.addf %369, %375 : vector<32x64xf32>
    %cst_132 = arith.constant 0.797884583 : f32
    %377 = vector.broadcast %cst_132 : f32 to vector<32x64xf32>
    %378 = arith.mulf %377, %376 : vector<32x64xf32>
    %379 = math.tanh %378 : vector<32x64xf32>
    %cst_133 = arith.constant 1.000000e+00 : f32
    %380 = vector.broadcast %cst_133 : f32 to vector<32x64xf32>
    %381 = arith.addf %380, %379 : vector<32x64xf32>
    %382 = arith.mulf %371, %381 : vector<32x64xf32>
    %cst_134 = arith.constant 0.000000e+00 : f32
    %383 = vector.shape_cast %4 : vector<32x1xi1> to vector<32x1xi1>
    %384 = vector.broadcast %383 : vector<32x1xi1> to vector<32x64xi1>
    %385 = vector.broadcast %cst_134 : f32 to vector<32x64xf32>
    %386 = arith.select %384, %382, %385 : vector<32x64xi1>, vector<32x64xf32>
    %387 = arith.mulf %386, %386 : vector<32x64xf32>
    %388 = arith.truncf %387 : vector<32x64xf32> to vector<32x64xbf16>
    %cst_135 = arith.constant dense<0.000000e+00> : vector<8x64xf32>
    %389 = tpu.matmul %79, %388, %cst_135 {dimension_numbers = #tpu.dot_dimension_numbers<[1], [0], [0], [1], [0, 0, 1, 1], [], []>} : vector<8x32xbf16>, vector<32x64xbf16>, vector<8x64xf32> -> vector<8x64xf32>
    %390 = math.sqrt %389 : vector<8x64xf32>
    %cst_136 = arith.constant dense<0.000000e+00> : vector<8xf32>
    %391 = vector.multi_reduction <add>, %390, %cst_136 [1] : vector<8x64xf32> to vector<8xf32>
    %392 = vector.shape_cast %391 : vector<8xf32> to vector<8x1xf32>
    %cst_137 = arith.constant 6.400000e+01 : f32
    %393 = vector.broadcast %cst_137 : f32 to vector<8x1xf32>
    %394 = arith.divf %392, %393 : vector<8x1xf32>
    %cst_138 = arith.constant 9.99999997E-7 : f32
    %395 = vector.broadcast %cst_138 : f32 to vector<8x1xf32>
    %396 = arith.addf %394, %395 : vector<8x1xf32>
    %397 = tpu.reciprocal %396 {approx = true} : vector<8x1xf32> -> vector<8x1xf32>
    %398 = vector.broadcast %397 : vector<8x1xf32> to vector<8x64xf32>
    %399 = arith.mulf %390, %398 : vector<8x64xf32>
    %400 = vector.extract_strided_slice %399 {offsets = [0, 0], sizes = [1, 64], strides = [1, 1]} : vector<8x64xf32> to vector<1x64xf32>
    %401 = vector.shape_cast %400 : vector<1x64xf32> to vector<1x64xf32>
    %402 = vector.broadcast %401 : vector<1x64xf32> to vector<16x64xf32>
    %403 = vector.extract_strided_slice %399 {offsets = [1, 0], sizes = [1, 64], strides = [1, 1]} : vector<8x64xf32> to vector<1x64xf32>
    %404 = vector.shape_cast %403 : vector<1x64xf32> to vector<1x64xf32>
    %405 = vector.broadcast %404 : vector<1x64xf32> to vector<16x64xf32>
    %406 = tpu.concatenate %402, %405 in 0 : vector<16x64xf32>, vector<16x64xf32> -> vector<32x64xf32>
    %c1_139 = arith.constant 1 : index
    %c0_140 = arith.constant 0 : index
    %c0_141 = arith.constant 0 : index
    %407 = vector.load %arg11[%c1_139, %c0_140, %c0_141] : memref<2x1x64xf32, #tpu.memory_space<vmem>>, vector<1x1x64xf32>
    %408 = vector.shape_cast %407 : vector<1x1x64xf32> to vector<1x64xf32>
    %409 = arith.mulf %386, %406 : vector<32x64xf32>
    %410 = vector.broadcast %408 : vector<1x64xf32> to vector<32x64xf32>
    %411 = arith.mulf %410, %409 : vector<32x64xf32>
    %c1_142 = arith.constant 1 : index
    %c0_143 = arith.constant 0 : index
    %c0_144 = arith.constant 0 : index
    %412 = vector.load %arg12[%c1_142, %c0_143, %c0_144] : memref<2x1x64xf32, #tpu.memory_space<vmem>>, vector<1x1x64xf32>
    %413 = vector.shape_cast %412 : vector<1x1x64xf32> to vector<1x64xf32>
    %414 = vector.broadcast %413 : vector<1x64xf32> to vector<32x64xf32>
    %415 = arith.addf %411, %414 : vector<32x64xf32>
    %416 = arith.addf %415, %386 : vector<32x64xf32>
    %417 = arith.truncf %416 : vector<32x64xf32> to vector<32x64xbf16>
    %c1_145 = arith.constant 1 : index
    %c0_146 = arith.constant 0 : index
    %c0_147 = arith.constant 0 : index
    %418 = vector.load %arg13[%c1_145, %c0_146, %c0_147] : memref<2x64x32xbf16, #tpu.memory_space<vmem>>, vector<1x64x32xbf16>
    %419 = vector.shape_cast %418 : vector<1x64x32xbf16> to vector<64x32xbf16>
    %cst_148 = arith.constant dense<0.000000e+00> : vector<32x32xf32>
    %420 = tpu.matmul %417, %419, %cst_148 {dimension_numbers = #tpu.dot_dimension_numbers<[1], [0], [0], [1], [0, 0, 1, 1], [], []>} : vector<32x64xbf16>, vector<64x32xbf16>, vector<32x32xf32> -> vector<32x32xf32>
    %421 = arith.addf %266, %420 : vector<32x32xf32>
    %c1_149 = arith.constant 1 : index
    %c0_150 = arith.constant 0 : index
    %c0_151 = arith.constant 0 : index
    %422 = vector.load %arg14[%c1_149, %c0_150, %c0_151] : memref<2x1x32xf32, #tpu.memory_space<vmem>>, vector<1x1x32xf32>
    %423 = vector.shape_cast %422 : vector<1x1x32xf32> to vector<1x32xf32>
    %424 = vector.broadcast %423 : vector<1x32xf32> to vector<32x32xf32>
    %425 = arith.addf %421, %424 : vector<32x32xf32>
    %cst_152 = arith.constant 0.000000e+00 : f32
    %426 = vector.shape_cast %4 : vector<32x1xi1> to vector<32x1xi1>
    %427 = vector.broadcast %426 : vector<32x1xi1> to vector<32x32xi1>
    %428 = vector.broadcast %cst_152 : f32 to vector<32x32xf32>
    %429 = arith.select %427, %425, %428 : vector<32x32xi1>, vector<32x32xf32>
    %430 = vector.extract_strided_slice %429 {offsets = [0, 0], sizes = [16, 32], strides = [1, 1]} : vector<32x32xf32> to vector<16x32xf32>
    %c0_153 = arith.constant 0 : index
    %c0_154 = arith.constant 0 : index
    %c0_155 = arith.constant 0 : index
    %431 = vector.load %arg15[%c0_153, %c0_154, %c0_155] : memref<2x16x32xf32, #tpu.memory_space<vmem>>, vector<1x16x32xf32>
    %432 = vector.shape_cast %431 : vector<1x16x32xf32> to vector<16x32xf32>
    %433 = vector.shape_cast %430 : vector<16x32xf32> to vector<1x16x32xf32>
    tpu.vector_store %arg15[%c0_153, %c0_154, %c0_155], %433 {strides = array<i32>} : memref<2x16x32xf32, #tpu.memory_space<vmem>>, vector<1x16x32xf32>,
    %434 = vector.extract_strided_slice %429 {offsets = [16, 0], sizes = [16, 32], strides = [1, 1]} : vector<32x32xf32> to vector<16x32xf32>
    %c1_156 = arith.constant 1 : index
    %c0_157 = arith.constant 0 : index
    %c0_158 = arith.constant 0 : index
    %435 = vector.load %arg15[%c1_156, %c0_157, %c0_158] : memref<2x16x32xf32, #tpu.memory_space<vmem>>, vector<1x16x32xf32>
    %436 = vector.shape_cast %435 : vector<1x16x32xf32> to vector<16x32xf32>
    %437 = vector.shape_cast %434 : vector<16x32xf32> to vector<1x16x32xf32>
    tpu.vector_store %arg15[%c1_156, %c0_157, %c0_158], %437 {strides = array<i32>} : memref<2x16x32xf32, #tpu.memory_space<vmem>>, vector<1x16x32xf32>,
    return
  }
  func.func @transform_0(%arg0: i32, %arg1: memref<1xi32, #tpu.memory_space<smem>>) -> (i32, i32, i32) {
    %c0_i32 = arith.constant 0 : i32
    %c0_i32_0 = arith.constant 0 : i32
    %c0_i32_1 = arith.constant 0 : i32
    return %arg0, %c0_i32, %c0_i32_0 : i32, i32, i32
  }
  func.func @transform_1(%arg0: i32, %arg1: memref<1xi32, #tpu.memory_space<smem>>) -> (i32, i32) {
    %c0_i32 = arith.constant 0 : i32
    %c0_i32_0 = arith.constant 0 : i32
    %c0_i32_1 = arith.constant 0 : i32
    return %c0_i32, %c0_i32_0 : i32, i32
  }
  func.func @transform_2(%arg0: i32, %arg1: memref<1xi32, #tpu.memory_space<smem>>) -> (i32, i32) {
    %c0_i32 = arith.constant 0 : i32
    %c0_i32_0 = arith.constant 0 : i32
    %c0_i32_1 = arith.constant 0 : i32
    return %c0_i32, %c0_i32_0 : i32, i32
  }
  func.func @transform_3(%arg0: i32, %arg1: memref<1xi32, #tpu.memory_space<smem>>) -> (i32, i32, i32) {
    %c0_i32 = arith.constant 0 : i32
    %c0_i32_0 = arith.constant 0 : i32
    %c0_i32_1 = arith.constant 0 : i32
    %c0_i32_2 = arith.constant 0 : i32
    return %c0_i32, %c0_i32_0, %c0_i32_1 : i32, i32, i32
  }
  func.func @transform_4(%arg0: i32, %arg1: memref<1xi32, #tpu.memory_space<smem>>) -> (i32, i32, i32) {
    %c0_i32 = arith.constant 0 : i32
    %c0_i32_0 = arith.constant 0 : i32
    %c0_i32_1 = arith.constant 0 : i32
    %c0_i32_2 = arith.constant 0 : i32
    return %c0_i32, %c0_i32_0, %c0_i32_1 : i32, i32, i32
  }
  func.func @transform_5(%arg0: i32, %arg1: memref<1xi32, #tpu.memory_space<smem>>) -> (i32, i32, i32) {
    %c0_i32 = arith.constant 0 : i32
    %c0_i32_0 = arith.constant 0 : i32
    %c0_i32_1 = arith.constant 0 : i32
    %c0_i32_2 = arith.constant 0 : i32
    return %c0_i32, %c0_i32_0, %c0_i32_1 : i32, i32, i32
  }
  func.func @transform_6(%arg0: i32, %arg1: memref<1xi32, #tpu.memory_space<smem>>) -> (i32, i32, i32) {
    %c0_i32 = arith.constant 0 : i32
    %c0_i32_0 = arith.constant 0 : i32
    %c0_i32_1 = arith.constant 0 : i32
    %c0_i32_2 = arith.constant 0 : i32
    return %c0_i32, %c0_i32_0, %c0_i32_1 : i32, i32, i32
  }
  func.func @transform_7(%arg0: i32, %arg1: memref<1xi32, #tpu.memory_space<smem>>) -> (i32, i32, i32) {
    %c0_i32 = arith.constant 0 : i32
    %c0_i32_0 = arith.constant 0 : i32
    %c0_i32_1 = arith.constant 0 : i32
    %c0_i32_2 = arith.constant 0 : i32
    return %c0_i32, %c0_i32_0, %c0_i32_1 : i32, i32, i32
  }
  func.func @transform_8(%arg0: i32, %arg1: memref<1xi32, #tpu.memory_space<smem>>) -> (i32, i32, i32) {
    %c0_i32 = arith.constant 0 : i32
    %c0_i32_0 = arith.constant 0 : i32
    %c0_i32_1 = arith.constant 0 : i32
    %c0_i32_2 = arith.constant 0 : i32
    return %c0_i32, %c0_i32_0, %c0_i32_1 : i32, i32, i32
  }
  func.func @transform_9(%arg0: i32, %arg1: memref<1xi32, #tpu.memory_space<smem>>) -> (i32, i32, i32) {
    %c0_i32 = arith.constant 0 : i32
    %c0_i32_0 = arith.constant 0 : i32
    %c0_i32_1 = arith.constant 0 : i32
    %c0_i32_2 = arith.constant 0 : i32
    return %c0_i32, %c0_i32_0, %c0_i32_1 : i32, i32, i32
  }
  func.func @transform_10(%arg0: i32, %arg1: memref<1xi32, #tpu.memory_space<smem>>) -> (i32, i32, i32) {
    %c0_i32 = arith.constant 0 : i32
    %c0_i32_0 = arith.constant 0 : i32
    %c0_i32_1 = arith.constant 0 : i32
    %c0_i32_2 = arith.constant 0 : i32
    return %c0_i32, %c0_i32_0, %c0_i32_1 : i32, i32, i32
  }
  func.func @transform_11(%arg0: i32, %arg1: memref<1xi32, #tpu.memory_space<smem>>) -> (i32, i32, i32) {
    %c0_i32 = arith.constant 0 : i32
    %c0_i32_0 = arith.constant 0 : i32
    %c0_i32_1 = arith.constant 0 : i32
    %c0_i32_2 = arith.constant 0 : i32
    return %c0_i32, %c0_i32_0, %c0_i32_1 : i32, i32, i32
  }
  func.func @transform_12(%arg0: i32, %arg1: memref<1xi32, #tpu.memory_space<smem>>) -> (i32, i32, i32) {
    %c0_i32 = arith.constant 0 : i32
    %c0_i32_0 = arith.constant 0 : i32
    %c0_i32_1 = arith.constant 0 : i32
    %c0_i32_2 = arith.constant 0 : i32
    return %c0_i32, %c0_i32_0, %c0_i32_1 : i32, i32, i32
  }
  func.func @transform_13(%arg0: i32, %arg1: memref<1xi32, #tpu.memory_space<smem>>) -> (i32, i32, i32) {
    %c0_i32 = arith.constant 0 : i32
    %c0_i32_0 = arith.constant 0 : i32
    %c0_i32_1 = arith.constant 0 : i32
    return %arg0, %c0_i32, %c0_i32_0 : i32, i32, i32
  }
}

</mosaic_0001>

<llo_original>
// kernel: tpu_custom_call.1
$region0: #{tpu_custom_call.1}
  #allocation0 [shape = 'u32[]', space=smem, size = 0x4, offset = 0x4, fixed_abs, tag = 'smem constant byte address 0x4 - core index']
  #allocation1 [shape = 'u32[144,128]{1,0:T(1,128)}', space=vmem, size = 0x12000, scoped, tag = 'internal scratch']
  #allocation2 [shape = 's32[1]{0}', space=sflag, size = 0x4, scoped, tag = 'scoped memory for tpu_custom_call.1']
  #allocation3 [shape = 's32[1]{0:T(128)S(6)}', space=smem, size = 0x200, scoped, tag = 'prefetched SMEM operand 0']
  %s0 = inlined_call_operand.<no memory space> [shape: s32[1], index: 0, kind: input, shape index: {}]
  %s1 = inlined_call_operand.vmem [shape: s32[2,16,1], index: 1, kind: input, shape index: {}]
  %s2 = inlined_call_operand.vmem [shape: bf16[256,32], index: 2, kind: input, shape index: {}]
  %s3 = inlined_call_operand.vmem [shape: f32[16,32], index: 3, kind: input, shape index: {}]
  %s4 = inlined_call_operand.vmem [shape: f32[2,7,32], index: 4, kind: input, shape index: {}]
  %s5 = inlined_call_operand.vmem [shape: f32[2,1,32], index: 5, kind: input, shape index: {}]
  %s6 = inlined_call_operand.vmem [shape: f32[2,1,32], index: 6, kind: input, shape index: {}]
  %s7 = inlined_call_operand.vmem [shape: f32[2,1,32], index: 7, kind: input, shape index: {}]
  %s8 = inlined_call_operand.vmem [shape: bf16[2,32,64], index: 8, kind: input, shape index: {}]
  %s9 = inlined_call_operand.vmem [shape: f32[2,1,64], index: 9, kind: input, shape index: {}]
  %s10 = inlined_call_operand.vmem [shape: f32[2,1,64], index: 10, kind: input, shape index: {}]
  %s11 = inlined_call_operand.vmem [shape: f32[2,1,64], index: 11, kind: input, shape index: {}]
  %s12 = inlined_call_operand.vmem [shape: bf16[2,64,32], index: 12, kind: input, shape index: {}]
  %s13 = inlined_call_operand.vmem [shape: f32[2,1,32], index: 13, kind: input, shape index: {}]
  %s14 = inlined_call_operand.hbm [shape: f32[2,16,32], index: 14, kind: output, shape index: {}]
  %s15 = sld [smem:[#allocation0]]
  $region62: #{tpu_custom_call.1} parent=0
    _
  %s17 = ssub.s32 1, %s15
  %s18 = scalar_select 0, %s17, %s15
  %19 = sst [smem:[#allocation3]] %s0
  $region1: #{tpu_custom_call.1} parent=0
    #allocation4 [shape = 'u8[16384]{0}', space=vmem, size = 0x4000, scoped, tag = 'output window, operand 0, single buffered']
    #allocation5 [shape = 's32[1]{0}', space=sflag, size = 0x4, scoped, tag = 'scoped memory for tpu_custom_call.1']
    %20 = vsyncpa [#allocation5], 0
    // Predicated region
    $region2: #{tpu_custom_call.1} parent=1 // pred_check
      _
    $region3: #{tpu_custom_call.1} parent=1 // pred_check_branch
      %22 = sbr.rel (0) target = $region5
    $region4: #{tpu_custom_call.1} parent=1 // pred_region
      _
    $region5: #{tpu_custom_call.1} parent=1 // pred_fallthru
      _
    // Predicated region
    $region6: #{tpu_custom_call.1} parent=1 // pred_check
      _
    $region7: #{tpu_custom_call.1} parent=1 // pred_check_branch
      %24 = sbr.rel (0) target = $region9
    $region8: #{tpu_custom_call.1} parent=1 // pred_region
      _
    $region9: #{tpu_custom_call.1} parent=1 // pred_fallthru
      _
    // Predicated region
    $region10: #{tpu_custom_call.1} parent=1 // pred_check
      _
    $region11: #{tpu_custom_call.1} parent=1 // pred_check_branch
      %26 = sbr.rel (0) target = $region13
    $region12: #{tpu_custom_call.1} parent=1 // pred_region
      _
    $region13: #{tpu_custom_call.1} parent=1 // pred_fallthru
      _
    // Predicated region
    $region14: #{tpu_custom_call.1} parent=1 // pred_check
      _
    $region15: #{tpu_custom_call.1} parent=1 // pred_check_branch
      %28 = sbr.rel (0) target = $region17
    $region16: #{tpu_custom_call.1} parent=1 // pred_region
      _
    $region17: #{tpu_custom_call.1} parent=1 // pred_fallthru
      _
    // Predicated region
    $region18: #{tpu_custom_call.1} parent=1 // pred_check
      _
    $region19: #{tpu_custom_call.1} parent=1 // pred_check_branch
      %30 = sbr.rel (0) target = $region21
    $region20: #{tpu_custom_call.1} parent=1 // pred_region
      _
    $region21: #{tpu_custom_call.1} parent=1 // pred_fallthru
      _
    // Predicated region
    $region22: #{tpu_custom_call.1} parent=1 // pred_check
      _
    $region23: #{tpu_custom_call.1} parent=1 // pred_check_branch
      %32 = sbr.rel (0) target = $region25
    $region24: #{tpu_custom_call.1} parent=1 // pred_region
      _
    $region25: #{tpu_custom_call.1} parent=1 // pred_fallthru
      _
    // Predicated region
    $region26: #{tpu_custom_call.1} parent=1 // pred_check
      _
    $region27: #{tpu_custom_call.1} parent=1 // pred_check_branch
      %34 = sbr.rel (0) target = $region29
    $region28: #{tpu_custom_call.1} parent=1 // pred_region
      _
    $region29: #{tpu_custom_call.1} parent=1 // pred_fallthru
      _
    // Predicated region
    $region30: #{tpu_custom_call.1} parent=1 // pred_check
      _
    $region31: #{tpu_custom_call.1} parent=1 // pred_check_branch
      %36 = sbr.rel (0) target = $region33
    $region32: #{tpu_custom_call.1} parent=1 // pred_region
      _
    $region33: #{tpu_custom_call.1} parent=1 // pred_fallthru
      _
    // Predicated region
    $region34: #{tpu_custom_call.1} parent=1 // pred_check
      _
    $region35: #{tpu_custom_call.1} parent=1 // pred_check_branch
      %38 = sbr.rel (0) target = $region37
    $region36: #{tpu_custom_call.1} parent=1 // pred_region
      _
    $region37: #{tpu_custom_call.1} parent=1 // pred_fallthru
      _
    // Predicated region
    $region38: #{tpu_custom_call.1} parent=1 // pred_check
      _
    $region39: #{tpu_custom_call.1} parent=1 // pred_check_branch
      %40 = sbr.rel (0) target = $region41
    $region40: #{tpu_custom_call.1} parent=1 // pred_region
      _
    $region41: #{tpu_custom_call.1} parent=1 // pred_fallthru
      _
    // Predicated region
    $region42: #{tpu_custom_call.1} parent=1 // pred_check
      _
    $region43: #{tpu_custom_call.1} parent=1 // pred_check_branch
      %42 = sbr.rel (0) target = $region45
    $region44: #{tpu_custom_call.1} parent=1 // pred_region
      _
    $region45: #{tpu_custom_call.1} parent=1 // pred_fallthru
      _
    // Predicated region
    $region46: #{tpu_custom_call.1} parent=1 // pred_check
      _
    $region47: #{tpu_custom_call.1} parent=1 // pred_check_branch
      %44 = sbr.rel (0) target = $region49
    $region48: #{tpu_custom_call.1} parent=1 // pred_region
      _
    $region49: #{tpu_custom_call.1} parent=1 // pred_fallthru
      _
    // Predicated region
    $region50: #{tpu_custom_call.1} parent=1 // pred_check
      _
    $region51: #{tpu_custom_call.1} parent=1 // pred_check_branch
      %46 = sbr.rel (0) target = $region53
    $region52: #{tpu_custom_call.1} parent=1 // pred_region
      _
    $region53: #{tpu_custom_call.1} parent=1 // pred_fallthru
      _
    %s48 = sld [smem:[#allocation3]]
    %v49 = vlaneseq
    %v50 = vshrl.u32 %v49, 7
    %v51 = vadd.s32 %v50, 8
    %v52 = vstv %s48
    %vm53 = vcmp.lt.s32.totalorder %v50, %v52
    %vm54 = vcmp.lt.s32.totalorder %v51, %v52
    %v55 = vadd.s32 %v50, 4294967293
    %v56 = vadd.s32 %v51, 4294967293
    %vm57 = vcmp.ge.s32.totalorder %v55, 0
    %vm58 = vcmp.ge.s32.totalorder %v56, 0
    %vm59 = vcmp.lt.s32.totalorder %v55, 16
    %vm60 = vcmp.lt.s32.totalorder %v56, 16
    %vm61 = vmand %vm57, %vm59
    %vm62 = vmand %vm58, %vm60
    %v63 = vadd.s32 %v50, 4294967294
    %v64 = vadd.s32 %v51, 4294967294
    %vm65 = vcmp.ge.s32.totalorder %v63, 0
    %vm66 = vcmp.ge.s32.totalorder %v64, 0
    %vm67 = vcmp.lt.s32.totalorder %v63, 16
    %vm68 = vcmp.lt.s32.totalorder %v64, 16
    %vm69 = vmand %vm65, %vm67
    %vm70 = vmand %vm66, %vm68
    %v71 = vadd.s32 %v50, 4294967295
    %v72 = vadd.s32 %v51, 4294967295
    %vm73 = vcmp.ge.s32.totalorder %v71, 0
    %vm74 = vcmp.ge.s32.totalorder %v72, 0
    %vm75 = vcmp.lt.s32.totalorder %v71, 16
    %vm76 = vcmp.lt.s32.totalorder %v72, 16
    %vm77 = vmand %vm73, %vm75
    %vm78 = vmand %vm74, %vm76
    %vm79 = vcmp.ge.s32.totalorder %v50, 0
    %vm80 = vcmp.ge.s32.totalorder %v51, 0
    %vm81 = vcmp.lt.s32.totalorder %v50, 16
    %vm82 = vcmp.lt.s32.totalorder %v51, 16
    %vm83 = vmand %vm79, %vm81
    %vm84 = vmand %vm80, %vm82
    %v85 = vadd.s32 %v50, 1
    %v86 = vadd.s32 %v51, 1
    %vm87 = vcmp.ge.s32.totalorder %v85, 0
    %vm88 = vcmp.ge.s32.totalorder %v86, 0
    %vm89 = vcmp.lt.s32.totalorder %v85, 16
    %vm90 = vcmp.lt.s32.totalorder %v86, 16
    %vm91 = vmand %vm87, %vm89
    %vm92 = vmand %vm88, %vm90
    %v93 = vadd.s32 %v50, 2
    %v94 = vadd.s32 %v51, 2
    %vm95 = vcmp.ge.s32.totalorder %v93, 0
    %vm96 = vcmp.ge.s32.totalorder %v94, 0
    %vm97 = vcmp.lt.s32.totalorder %v93, 16
    %vm98 = vcmp.lt.s32.totalorder %v94, 16
    %vm99 = vmand %vm95, %vm97
    %vm100 = vmand %vm96, %vm98
    %v101 = vadd.s32 %v50, 3
    %v102 = vadd.s32 %v51, 3
    %vm103 = vcmp.ge.s32.totalorder %v101, 0
    %vm104 = vcmp.ge.s32.totalorder %v102, 0
    %vm105 = vcmp.lt.s32.totalorder %v101, 16
    %vm106 = vcmp.lt.s32.totalorder %v102, 16
    %vm107 = vmand %vm103, %vm105
    %vm108 = vmand %vm104, %vm106
    %v109 = vlaneseq
    %v110 = vand.u32 %v109, 127
    %v111 = vmul.u32 %v50, 16
    %vm112 = vcmp.ge.s32.totalorder %v110, %v111
    %v113 = vadd.s32 %v111, 16
    %vm114 = vcmp.lt.s32.totalorder %v110, %v113
    %vm115 = vmand %vm112, %vm114
    %v116 = vsel %vm115, 1, 0
    %v117 = vcvt.s32.f32 %v116
    %v118 = vpack.c.bf16 %v117, %v117
    %v119 = vld [vmem:[%s1] sm:$0xff]
    %v120 = vld [vmem:[%s1 + $0x8] sm:$0xff]
    %s121 = scalar_lea.vmem %s1, 16
    %v122 = vld [vmem:[%s121] sm:$0xff]
    %v123 = vld [vmem:[%s121 + $0x8] sm:$0xff]
    %vm124 = vcmp.gt.s32.totalorder %v119, 0
    %v125 = vsel %vm124, %v119, 0
    %vm126 = vcmp.gt.s32.totalorder %v120, 0
    %v127 = vsel %vm126, %v120, 0
    %vm128 = vcmp.gt.s32.totalorder %v122, 0
    %v129 = vsel %vm128, %v122, 0
    %vm130 = vcmp.gt.s32.totalorder %v123, 0
    %v131 = vsel %vm130, %v123, 0
    %v132 = vadd.s32 %v110, 128
    %133 = vset.pattern.permute.xlu0 0
    %134 = vperm.xlu0 %133, %v125
    %v135 = vpop.permute.xlu0 %134
    %136 = vset.pattern.permute.xlu0 0
    %137 = vperm.xlu0 %136, %v127
    %v138 = vpop.permute.xlu0 %137
    %139 = vset.pattern.permute.xlu0 0
    %140 = vperm.xlu0 %139, %v129
    %v141 = vpop.permute.xlu0 %140
    %142 = vset.pattern.permute.xlu0 0
    %143 = vperm.xlu0 %142, %v131
    %v144 = vpop.permute.xlu0 %143
    %vm145 = vcmp.eq.s32.totalorder %v135, %v110
    %vm146 = vcmp.eq.s32.totalorder %v135, %v132
    %vm147 = vcmp.eq.s32.totalorder %v138, %v110
    %vm148 = vcmp.eq.s32.totalorder %v138, %v132
    %vm149 = vcmp.eq.s32.totalorder %v141, %v110
    %vm150 = vcmp.eq.s32.totalorder %v141, %v132
    %vm151 = vcmp.eq.s32.totalorder %v144, %v110
    %vm152 = vcmp.eq.s32.totalorder %v144, %v132
    %v153 = vsel %vm145, 1, 0
    %v154 = vsel %vm146, 1, 0
    %v155 = vsel %vm147, 1, 0
    %v156 = vsel %vm148, 1, 0
    %v157 = vsel %vm149, 1, 0
    %v158 = vsel %vm150, 1, 0
    %v159 = vsel %vm151, 1, 0
    %v160 = vsel %vm152, 1, 0
    %v161 = vcvt.s32.f32 %v153
    %v162 = vcvt.s32.f32 %v154
    %v163 = vcvt.s32.f32 %v155
    %v164 = vcvt.s32.f32 %v156
    %v165 = vcvt.s32.f32 %v157
    %v166 = vcvt.s32.f32 %v158
    %v167 = vcvt.s32.f32 %v159
    %v168 = vcvt.s32.f32 %v160
    %v169 = vpack.c.bf16 %v163, %v161
    %v170 = vpack.c.bf16 %v164, %v162
    %v171 = vpack.c.bf16 %v167, %v165
    %v172 = vpack.c.bf16 %v168, %v166
    %v173 = vld [vmem:[%s2] sm:$0xf]
    %v174 = vld [vmem:[%s2 + $0x4] sm:$0xf]
    %v175 = vld [vmem:[%s2 + $0x8] sm:$0xf]
    %v176 = vld [vmem:[%s2 + $0xc] sm:$0xf]
    %v177 = vld [vmem:[%s2 + $0x10] sm:$0xf]
    %v178 = vld [vmem:[%s2 + $0x14] sm:$0xf]
    %v179 = vld [vmem:[%s2 + $0x18] sm:$0xf]
    %v180 = vld [vmem:[%s2 + $0x1c] sm:$0xf]
    %v181 = vld [vmem:[%s2 + $0x20] sm:$0xf]
    %v182 = vld [vmem:[%s2 + $0x24] sm:$0xf]
    %v183 = vld [vmem:[%s2 + $0x28] sm:$0xf]
    %v184 = vld [vmem:[%s2 + $0x2c] sm:$0xf]
    %v185 = vld [vmem:[%s2 + $0x30] sm:$0xf]
    %v186 = vld [vmem:[%s2 + $0x34] sm:$0xf]
    %v187 = vld [vmem:[%s2 + $0x38] sm:$0xf]
    %v188 = vld [vmem:[%s2 + $0x3c] sm:$0xf]
    %v189 = vld [vmem:[%s2 + $0x40] sm:$0xf]
    %v190 = vld [vmem:[%s2 + $0x44] sm:$0xf]
    %v191 = vld [vmem:[%s2 + $0x48] sm:$0xf]
    %v192 = vld [vmem:[%s2 + $0x4c] sm:$0xf]
    %v193 = vld [vmem:[%s2 + $0x50] sm:$0xf]
    %v194 = vld [vmem:[%s2 + $0x54] sm:$0xf]
    %v195 = vld [vmem:[%s2 + $0x58] sm:$0xf]
    %v196 = vld [vmem:[%s2 + $0x5c] sm:$0xf]
    %v197 = vld [vmem:[%s2 + $0x60] sm:$0xf]
    %v198 = vld [vmem:[%s2 + $0x64] sm:$0xf]
    %v199 = vld [vmem:[%s2 + $0x68] sm:$0xf]
    %v200 = vld [vmem:[%s2 + $0x6c] sm:$0xf]
    %v201 = vld [vmem:[%s2 + $0x70] sm:$0xf]
    %v202 = vld [vmem:[%s2 + $0x74] sm:$0xf]
    %v203 = vld [vmem:[%s2 + $0x78] sm:$0xf]
    %v204 = vld [vmem:[%s2 + $0x7c] sm:$0xf]
    %v205 = vld [vmem:[%s3] sm:$0xff]
    %v206 = vld [vmem:[%s3 + $0x8] sm:$0xff]
    %v239 = vunpack.c.l.b16 %v173
    %v240 = vunpack.c.l.b16 %v174
    %v241 = vunpack.c.l.b16 %v175
    %v242 = vunpack.c.l.b16 %v176
    %v243 = vunpack.c.l.b16 %v177
    %v244 = vunpack.c.l.b16 %v178
    %v245 = vunpack.c.l.b16 %v179
    %v246 = vunpack.c.l.b16 %v180
    %v247 = vunpack.c.l.b16 %v181
    %v248 = vunpack.c.l.b16 %v182
    %v249 = vunpack.c.l.b16 %v183
    %v250 = vunpack.c.l.b16 %v184
    %v251 = vunpack.c.l.b16 %v185
    %v252 = vunpack.c.l.b16 %v186
    %v253 = vunpack.c.l.b16 %v187
    %v254 = vunpack.c.l.b16 %v188
    %v255 = vunpack.c.l.b16 %v189
    %v256 = vunpack.c.l.b16 %v190
    %v257 = vunpack.c.l.b16 %v191
    %v258 = vunpack.c.l.b16 %v192
    %v259 = vunpack.c.l.b16 %v193
    %v260 = vunpack.c.l.b16 %v194
    %v261 = vunpack.c.l.b16 %v195
    %v262 = vunpack.c.l.b16 %v196
    %v263 = vunpack.c.l.b16 %v197
    %v264 = vunpack.c.l.b16 %v198
    %v265 = vunpack.c.l.b16 %v199
    %v266 = vunpack.c.l.b16 %v200
    %v267 = vunpack.c.l.b16 %v201
    %v268 = vunpack.c.l.b16 %v202
    %v269 = vunpack.c.l.b16 %v203
    %v270 = vunpack.c.l.b16 %v204
    %v271 = vpack.c.b16 %v240, %v239
    %v272 = vpack.c.b16 %v242, %v241
    %v273 = vpack.c.b16 %v244, %v243
    %v274 = vpack.c.b16 %v246, %v245
    %v275 = vpack.c.b16 %v248, %v247
    %v276 = vpack.c.b16 %v250, %v249
    %v277 = vpack.c.b16 %v252, %v251
    %v278 = vpack.c.b16 %v254, %v253
    %v279 = vpack.c.b16 %v256, %v255
    %v280 = vpack.c.b16 %v258, %v257
    %v281 = vpack.c.b16 %v260, %v259
    %v282 = vpack.c.b16 %v262, %v261
    %v283 = vpack.c.b16 %v264, %v263
    %v284 = vpack.c.b16 %v266, %v265
    %v285 = vpack.c.b16 %v268, %v267
    %v286 = vpack.c.b16 %v270, %v269
    %303 = vmatprep.subr.bf16.mxu0 0
    %304 = vmatpush1.bf16.msra.mxu0 %v271
    %305 = vmatprep.subr.bf16.mxu0 0
    %306 = vmatpush1.bf16.msra.mxu0 %v272
    %307 = vmatprep.subr.bf16.mxu0 0
    %308 = vmatpush1.bf16.msra.mxu0 %v273
    %309 = vmatprep.subr.bf16.mxu0 0
    %310 = vmatpush1.bf16.msra.mxu0 %v274
    %311 = vmatprep.subr.bf16.mxu0 0
    %312 = vmatpush1.bf16.msra.mxu0 %v275
    %313 = vmatprep.subr.bf16.mxu0 0
    %314 = vmatpush1.bf16.msra.mxu0 %v276
    %315 = vmatprep.subr.bf16.mxu0 0
    %316 = vmatpush1.bf16.msra.mxu0 %v277
    %317 = vmatprep.subr.bf16.mxu0 0
    %318 = vmatpush1.bf16.msra.mxu0 %v278
    %319 = vmatprep.subr.bf16.mxu0 0
    %320 = vmatpush1.bf16.msra.mxu0 %v279
    %321 = vmatprep.subr.bf16.mxu0 0
    %322 = vmatpush1.bf16.msra.mxu0 %v280
    %323 = vmatprep.subr.bf16.mxu0 0
    %324 = vmatpush1.bf16.msra.mxu0 %v281
    %325 = vmatprep.subr.bf16.mxu0 0
    %326 = vmatpush1.bf16.msra.mxu0 %v282
    %327 = vmatprep.subr.bf16.mxu0 0
    %328 = vmatpush1.bf16.msra.mxu0 %v283
    %329 = vmatprep.subr.bf16.mxu0 0
    %330 = vmatpush1.bf16.msra.mxu0 %v284
    %331 = vmatprep.subr.bf16.mxu0 0
    %332 = vmatpush1.bf16.msra.mxu0 %v285
    %333 = vmatprep.subr.bf16.mxu0 0
    %334 = vmatpush1.bf16.msra.mxu0 %v286
    %335 = vmatprep.mubr.bf16.mxu0 %v170
    %336 = vmatmul.mubr.bf16.gmra.mrb[0].mxu0 %v169
    %v337 = vpop.f32.mrb[0].mxu0
    %v338 = vadd.f32 %v205, %v337
    %v339 = vpop.f32.mrb[0].mxu0
    %v340 = vpop.f32.mrb[0].mxu0
    %v341 = vadd.f32 %v206, %v340
    %v342 = vpop.f32.mrb[0].mxu0
    %343 = vmatprep.mubr.bf16.mxu0 %v172
    %344 = vmatmul.mubr.bf16.gmra.mrb[0].mxu0 %v171
    %v345 = vpop.f32.mrb[0].mxu0
    %v346 = vadd.f32 %v205, %v345
    %v347 = vpop.f32.mrb[0].mxu0
    %v348 = vpop.f32.mrb[0].mxu0
    %v349 = vadd.f32 %v206, %v348
    %v350 = vpop.f32.mrb[0].mxu0
    %351 = vdwg.mxu0
    %v352 = vsel %vm53, 1, 0
    %v353 = vsel %vm54, 1, 0
    %354 = vset.pattern.permute.xlu0 0
    %355 = vperm.xlu0 %354, %v352
    %v356 = vpop.permute.xlu0 %355
    %357 = vset.pattern.permute.xlu0 0
    %358 = vperm.xlu0 %357, %v353
    %v359 = vpop.permute.xlu0 %358
    %vm360 = vcmp.eq.s32.totalorder %v356, 1
    %vm361 = vcmp.eq.s32.totalorder %v359, 1
    %v362 = vsel %vm360, %v338, 0.0
    %v363 = vsel %vm361, %v341, 0.0
    %v364 = vsel %vm360, %v346, 0.0
    %v365 = vsel %vm361, %v349, 0.0
    %v366 = vld [vmem:[%s4] sm:$0x7f]
    %v367 = vrot.slane %v362, 5
    %v368 = vrot.slane %v363, 5
    %v369 = vrot.slane %v364, 5
    %v370 = vrot.slane %v365, 5
    %vm371 = vcmp.lt.s32.totalorder %v50, 3
    %v372 = vsel %vm371, %v369, %v370
    %v373 = vsel %vm371, %v368, %v369
    %v374 = vsel %vm371, %v367, %v368
    %v375 = vsel %vm371, %v370, %v367
    %v376 = vsel %vm61, 1, 0
    %v377 = vsel %vm62, 1, 0
    %378 = vset.pattern.permute.xlu0 0
    %379 = vperm.xlu0 %378, %v376
    %v380 = vpop.permute.xlu0 %379
    %381 = vset.pattern.permute.xlu0 0
    %382 = vperm.xlu0 %381, %v377
    %v383 = vpop.permute.xlu0 %382
    %vm384 = vcmp.eq.s32.totalorder %v380, 1
    %vm385 = vcmp.eq.s32.totalorder %v383, 1
    %v386 = vsel %vm384, %v375, 0.0
    %v387 = vsel %vm385, %v374, 0.0
    %v388 = vsel %vm384, %v373, 0.0
    %v389 = vsel %vm385, %v372, 0.0
    %v390 = vlaneseq
    %v391 = vshrl.u32 %v390, 7
    %v392 = vsub.s32 0, %v391
    %v393 = vrot.slane %v366, %v392
    %v394 = vmul.f32 %v386, %v393
    %v395 = vmul.f32 %v387, %v393
    %v396 = vmul.f32 %v388, %v393
    %v397 = vmul.f32 %v389, %v393
    %v398 = vadd.f32 %v394, 0.0
    %v399 = vadd.f32 %v395, 0.0
    %v400 = vadd.f32 %v396, 0.0
    %v401 = vadd.f32 %v397, 0.0
    %v402 = vrot.slane %v362, 6
    %v403 = vrot.slane %v363, 6
    %v404 = vrot.slane %v364, 6
    %v405 = vrot.slane %v365, 6
    %vm406 = vcmp.lt.s32.totalorder %v50, 2
    %v407 = vsel %vm406, %v404, %v405
    %v408 = vsel %vm406, %v403, %v404
    %v409 = vsel %vm406, %v402, %v403
    %v410 = vsel %vm406, %v405, %v402
    %v411 = vsel %vm69, 1, 0
    %v412 = vsel %vm70, 1, 0
    %413 = vset.pattern.permute.xlu0 0
    %414 = vperm.xlu0 %413, %v411
    %v415 = vpop.permute.xlu0 %414
    %416 = vset.pattern.permute.xlu0 0
    %417 = vperm.xlu0 %416, %v412
    %v418 = vpop.permute.xlu0 %417
    %vm419 = vcmp.eq.s32.totalorder %v415, 1
    %vm420 = vcmp.eq.s32.totalorder %v418, 1
    %v421 = vsel %vm419, %v410, 0.0
    %v422 = vsel %vm420, %v409, 0.0
    %v423 = vsel %vm419, %v408, 0.0
    %v424 = vsel %vm420, %v407, 0.0
    %v425 = vlaneseq
    %v426 = vshrl.u32 %v425, 7
    %v427 = vsub.s32 1, %v426
    %v428 = vrot.slane %v366, %v427
    %v429 = vmul.f32 %v421, %v428
    %v430 = vmul.f32 %v422, %v428
    %v431 = vmul.f32 %v423, %v428
    %v432 = vmul.f32 %v424, %v428
    %v433 = vadd.f32 %v398, %v429
    %v434 = vadd.f32 %v399, %v430
    %v435 = vadd.f32 %v400, %v431
    %v436 = vadd.f32 %v401, %v432
    %v437 = vrot.slane %v362, 7
    %v438 = vrot.slane %v363, 7
    %v439 = vrot.slane %v364, 7
    %v440 = vrot.slane %v365, 7
    %vm441 = vcmp.lt.s32.totalorder %v50, 1
    %v442 = vsel %vm441, %v439, %v440
    %v443 = vsel %vm441, %v438, %v439
    %v444 = vsel %vm441, %v437, %v438
    %v445 = vsel %vm441, %v440, %v437
    %v446 = vsel %vm77, 1, 0
    %v447 = vsel %vm78, 1, 0
    %448 = vset.pattern.permute.xlu0 0
    %449 = vperm.xlu0 %448, %v446
    %v450 = vpop.permute.xlu0 %449
    %451 = vset.pattern.permute.xlu0 0
    %452 = vperm.xlu0 %451, %v447
    %v453 = vpop.permute.xlu0 %452
    %vm454 = vcmp.eq.s32.totalorder %v450, 1
    %vm455 = vcmp.eq.s32.totalorder %v453, 1
    %v456 = vsel %vm454, %v445, 0.0
    %v457 = vsel %vm455, %v444, 0.0
    %v458 = vsel %vm454, %v443, 0.0
    %v459 = vsel %vm455, %v442, 0.0
    %v460 = vlaneseq
    %v461 = vshrl.u32 %v460, 7
    %v462 = vsub.s32 2, %v461
    %v463 = vrot.slane %v366, %v462
    %v464 = vmul.f32 %v456, %v463
    %v465 = vmul.f32 %v457, %v463
    %v466 = vmul.f32 %v458, %v463
    %v467 = vmul.f32 %v459, %v463
    %v468 = vadd.f32 %v433, %v464
    %v469 = vadd.f32 %v434, %v465
    %v470 = vadd.f32 %v435, %v466
    %v471 = vadd.f32 %v436, %v467
    %v472 = vsel %vm83, 1, 0
    %v473 = vsel %vm84, 1, 0
    %474 = vset.pattern.permute.xlu0 0
    %475 = vperm.xlu0 %474, %v472
    %v476 = vpop.permute.xlu0 %475
    %477 = vset.pattern.permute.xlu0 0
    %478 = vperm.xlu0 %477, %v473
    %v479 = vpop.permute.xlu0 %478
    %vm480 = vcmp.eq.s32.totalorder %v476, 1
    %vm481 = vcmp.eq.s32.totalorder %v479, 1
    %v482 = vsel %vm480, %v362, 0.0
    %v483 = vsel %vm481, %v363, 0.0
    %v484 = vsel %vm480, %v364, 0.0
    %v485 = vsel %vm481, %v365, 0.0
    %v486 = vlaneseq
    %v487 = vshrl.u32 %v486, 7
    %v488 = vsub.s32 3, %v487
    %v489 = vrot.slane %v366, %v488
    %v490 = vmul.f32 %v482, %v489
    %v491 = vmul.f32 %v483, %v489
    %v492 = vmul.f32 %v484, %v489
    %v493 = vmul.f32 %v485, %v489
    %v494 = vadd.f32 %v468, %v490
    %v495 = vadd.f32 %v469, %v491
    %v496 = vadd.f32 %v470, %v492
    %v497 = vadd.f32 %v471, %v493
    %v498 = vrot.slane %v362, 1
    %v499 = vrot.slane %v363, 1
    %v500 = vrot.slane %v364, 1
    %v501 = vrot.slane %v365, 1
    %vm502 = vcmp.lt.s32.totalorder %v50, 7
    %v503 = vsel %vm502, %v500, %v501
    %v504 = vsel %vm502, %v499, %v500
    %v505 = vsel %vm502, %v498, %v499
    %v506 = vsel %vm502, %v501, %v498
    %v507 = vsel %vm91, 1, 0
    %v508 = vsel %vm92, 1, 0
    %509 = vset.pattern.permute.xlu0 0
    %510 = vperm.xlu0 %509, %v507
    %v511 = vpop.permute.xlu0 %510
    %512 = vset.pattern.permute.xlu0 0
    %513 = vperm.xlu0 %512, %v508
    %v514 = vpop.permute.xlu0 %513
    %vm515 = vcmp.eq.s32.totalorder %v511, 1
    %vm516 = vcmp.eq.s32.totalorder %v514, 1
    %v517 = vsel %vm515, %v505, 0.0
    %v518 = vsel %vm516, %v504, 0.0
    %v519 = vsel %vm515, %v503, 0.0
    %v520 = vsel %vm516, %v506, 0.0
    %v521 = vlaneseq
    %v522 = vshrl.u32 %v521, 7
    %v523 = vsub.s32 4, %v522
    %v524 = vrot.slane %v366, %v523
    %v525 = vmul.f32 %v517, %v524
    %v526 = vmul.f32 %v518, %v524
    %v527 = vmul.f32 %v519, %v524
    %v528 = vmul.f32 %v520, %v524
    %v529 = vadd.f32 %v494, %v525
    %v530 = vadd.f32 %v495, %v526
    %v531 = vadd.f32 %v496, %v527
    %v532 = vadd.f32 %v497, %v528
    %v533 = vrot.slane %v362, 2
    %v534 = vrot.slane %v363, 2
    %v535 = vrot.slane %v364, 2
    %v536 = vrot.slane %v365, 2
    %vm537 = vcmp.lt.s32.totalorder %v50, 6
    %v538 = vsel %vm537, %v535, %v536
    %v539 = vsel %vm537, %v534, %v535
    %v540 = vsel %vm537, %v533, %v534
    %v541 = vsel %vm537, %v536, %v533
    %v542 = vsel %vm99, 1, 0
    %v543 = vsel %vm100, 1, 0
    %544 = vset.pattern.permute.xlu0 0
    %545 = vperm.xlu0 %544, %v542
    %v546 = vpop.permute.xlu0 %545
    %547 = vset.pattern.permute.xlu0 0
    %548 = vperm.xlu0 %547, %v543
    %v549 = vpop.permute.xlu0 %548
    %vm550 = vcmp.eq.s32.totalorder %v546, 1
    %vm551 = vcmp.eq.s32.totalorder %v549, 1
    %v552 = vsel %vm550, %v540, 0.0
    %v553 = vsel %vm551, %v539, 0.0
    %v554 = vsel %vm550, %v538, 0.0
    %v555 = vsel %vm551, %v541, 0.0
    %v556 = vlaneseq
    %v557 = vshrl.u32 %v556, 7
    %v558 = vsub.s32 5, %v557
    %v559 = vrot.slane %v366, %v558
    %v560 = vmul.f32 %v552, %v559
    %v561 = vmul.f32 %v553, %v559
    %v562 = vmul.f32 %v554, %v559
    %v563 = vmul.f32 %v555, %v559
    %v564 = vadd.f32 %v529, %v560
    %v565 = vadd.f32 %v530, %v561
    %v566 = vadd.f32 %v531, %v562
    %v567 = vadd.f32 %v532, %v563
    %v568 = vrot.slane %v362, 3
    %v569 = vrot.slane %v363, 3
    %v570 = vrot.slane %v364, 3
    %v571 = vrot.slane %v365, 3
    %vm572 = vcmp.lt.s32.totalorder %v50, 5
    %v573 = vsel %vm572, %v570, %v571
    %v574 = vsel %vm572, %v569, %v570
    %v575 = vsel %vm572, %v568, %v569
    %v576 = vsel %vm572, %v571, %v568
    %v577 = vsel %vm107, 1, 0
    %v578 = vsel %vm108, 1, 0
    %579 = vset.pattern.permute.xlu0 0
    %580 = vperm.xlu0 %579, %v577
    %v581 = vpop.permute.xlu0 %580
    %582 = vset.pattern.permute.xlu0 0
    %583 = vperm.xlu0 %582, %v578
    %v584 = vpop.permute.xlu0 %583
    %vm585 = vcmp.eq.s32.totalorder %v581, 1
    %vm586 = vcmp.eq.s32.totalorder %v584, 1
    %v587 = vsel %vm585, %v575, 0.0
    %v588 = vsel %vm586, %v574, 0.0
    %v589 = vsel %vm585, %v573, 0.0
    %v590 = vsel %vm586, %v576, 0.0
    %v591 = vlaneseq
    %v592 = vshrl.u32 %v591, 7
    %v593 = vsub.s32 6, %v592
    %v594 = vrot.slane %v366, %v593
    %v595 = vmul.f32 %v587, %v594
    %v596 = vmul.f32 %v588, %v594
    %v597 = vmul.f32 %v589, %v594
    %v598 = vmul.f32 %v590, %v594
    %v599 = vadd.f32 %v564, %v595
    %v600 = vadd.f32 %v565, %v596
    %v601 = vadd.f32 %v566, %v597
    %v602 = vadd.f32 %v567, %v598
    %v603 = vld [vmem:[%s5] sm:$0x1]
    %v605 = vlaneseq
    %v606 = vshrl.u32 %v605, 7
    %v607 = vsub.s32 0, %v606
    %v608 = vrot.slane %v603, %v607
    %v610 = vadd.f32 %v599, %v608
    %v611 = vadd.f32 %v600, %v608
    %v612 = vadd.f32 %v601, %v608
    %v613 = vadd.f32 %v602, %v608
    %vm614 = vcmask 261120
    %v615 = vsel %vm614, %v610, 0.0
    %616 = vadd.xlane.f32.xlu0 %v615
    %v617 = vpop.xlane.xlu0 %616
    %v618 = vsel %vm614, %v611, 0.0
    %619 = vadd.xlane.f32.xlu0 %v618
    %v620 = vpop.xlane.xlu0 %619
    %v621 = vsel %vm614, %v612, 0.0
    %622 = vadd.xlane.f32.xlu0 %v621
    %v623 = vpop.xlane.xlu0 %622
    %v624 = vsel %vm614, %v613, 0.0
    %625 = vadd.xlane.f32.xlu0 %v624
    %v626 = vpop.xlane.xlu0 %625
    %v627 = vrcp.pop 32.0
    %v628 = vmul.f32 %v617, %v627
    %v629 = vmul.f32 %v620, %v627
    %v630 = vmul.f32 %v623, %v627
    %v631 = vmul.f32 %v626, %v627
    %v632 = vmul.f32 %v610, %v610
    %v633 = vmul.f32 %v611, %v611
    %v634 = vmul.f32 %v612, %v612
    %v635 = vmul.f32 %v613, %v613
    %v636 = vsel %vm614, %v632, 0.0
    %637 = vadd.xlane.f32.xlu0 %v636
    %v638 = vpop.xlane.xlu0 %637
    %v639 = vsel %vm614, %v633, 0.0
    %640 = vadd.xlane.f32.xlu0 %v639
    %v641 = vpop.xlane.xlu0 %640
    %v642 = vsel %vm614, %v634, 0.0
    %643 = vadd.xlane.f32.xlu0 %v642
    %v644 = vpop.xlane.xlu0 %643
    %v645 = vsel %vm614, %v635, 0.0
    %646 = vadd.xlane.f32.xlu0 %v645
    %v647 = vpop.xlane.xlu0 %646
    %v648 = vmul.f32 %v638, %v627
    %v649 = vmul.f32 %v641, %v627
    %v650 = vmul.f32 %v644, %v627
    %v651 = vmul.f32 %v647, %v627
    %v652 = vmul.f32 %v628, %v628
    %v653 = vmul.f32 %v629, %v629
    %v654 = vmul.f32 %v630, %v630
    %v655 = vmul.f32 %v631, %v631
    %v656 = vsub.f32 %v648, %v652
    %v657 = vsub.f32 %v649, %v653
    %v658 = vsub.f32 %v650, %v654
    %v659 = vsub.f32 %v651, %v655
    %v660 = vsub.f32 %v610, %v628
    %v661 = vsub.f32 %v611, %v629
    %v662 = vsub.f32 %v612, %v630
    %v663 = vsub.f32 %v613, %v631
    %v664 = vadd.f32 %v656, 1e-06
    %v665 = vadd.f32 %v657, 1e-06
    %v666 = vadd.f32 %v658, 1e-06
    %v667 = vadd.f32 %v659, 1e-06
    %v668 = vrsqrt.pop %v664
    %v669 = vrsqrt.pop %v665
    %v670 = vrsqrt.pop %v666
    %v671 = vrsqrt.pop %v667
    %v672 = vmul.f32 %v660, %v668
    %v673 = vmul.f32 %v661, %v669
    %v674 = vmul.f32 %v662, %v670
    %v675 = vmul.f32 %v663, %v671
    %v676 = vld [vmem:[%s6] sm:$0x1]
    %v678 = vlaneseq
    %v679 = vshrl.u32 %v678, 7
    %v680 = vsub.s32 0, %v679
    %v681 = vrot.slane %v676, %v680
    %v683 = vmul.f32 %v672, %v681
    %v684 = vmul.f32 %v673, %v681
    %v685 = vmul.f32 %v674, %v681
    %v686 = vmul.f32 %v675, %v681
    %v687 = vld [vmem:[%s7] sm:$0x1]
    %v689 = vlaneseq
    %v690 = vshrl.u32 %v689, 7
    %v691 = vsub.s32 0, %v690
    %v692 = vrot.slane %v687, %v691
    %v694 = vadd.f32 %v683, %v692
    %v695 = vadd.f32 %v684, %v692
    %v696 = vadd.f32 %v685, %v692
    %v697 = vadd.f32 %v686, %v692
    %v698 = vpack.c.bf16 %v695, %v694
    %v699 = vpack.c.bf16 %v697, %v696
    %v700 = vld [vmem:[%s8] sm:$0xf]
    %v701 = vld [vmem:[%s8 + $0x4] sm:$0xf]
    %v702 = vld [vmem:[%s8 + $0x8] sm:$0xf]
    %v703 = vld [vmem:[%s8 + $0xc] sm:$0xf]
    %v704 = vld [vmem:[%s9] sm:$0x1]
    %v706 = vlaneseq
    %v707 = vshrl.u32 %v706, 7
    %v708 = vsub.s32 0, %v707
    %v709 = vrot.slane %v704, %v708
    %v715 = vunpack.c.l.b16 %v700
    %v716 = vunpack.c.l.b16 %v701
    %v717 = vunpack.c.l.b16 %v702
    %v718 = vunpack.c.l.b16 %v703
    %v719 = vpack.c.b16 %v716, %v715
    %v720 = vpack.c.b16 %v718, %v717
    %v724 = vsel %vm614, %v698, 0
    %v727 = vsel %vm614, %v699, 0
    %729 = vmatprep.subr.bf16.mxu0 0
    %730 = vmatpush1.bf16.msra.mxu0 %v719
    %731 = vmatprep.subr.bf16.mxu0 0
    %732 = vmatpush1.bf16.msra.mxu0 %v720
    %733 = vmatprep.subr.bf16.mxu0 0
    %734 = vmatpush1.bf16.msra.mxu0 0
    %735 = vmatprep.subr.bf16.mxu0 0
    %736 = vmatpush1.bf16.msra.mxu0 0
    %737 = vmatprep.subr.bf16.mxu0 0
    %738 = vmatpush1.bf16.msra.mxu0 0
    %739 = vmatprep.subr.bf16.mxu0 0
    %740 = vmatpush1.bf16.msra.mxu0 0
    %741 = vmatprep.subr.bf16.mxu0 0
    %742 = vmatpush1.bf16.msra.mxu0 0
    %743 = vmatprep.subr.bf16.mxu0 0
    %744 = vmatpush1.bf16.msra.mxu0 0
    %745 = vmatprep.subr.bf16.mxu0 0
    %746 = vmatpush1.bf16.msra.mxu0 0
    %747 = vmatprep.subr.bf16.mxu0 0
    %748 = vmatpush1.bf16.msra.mxu0 0
    %749 = vmatprep.subr.bf16.mxu0 0
    %750 = vmatpush1.bf16.msra.mxu0 0
    %751 = vmatprep.subr.bf16.mxu0 0
    %752 = vmatpush1.bf16.msra.mxu0 0
    %753 = vmatprep.subr.bf16.mxu0 0
    %754 = vmatpush1.bf16.msra.mxu0 0
    %755 = vmatprep.subr.bf16.mxu0 0
    %756 = vmatpush1.bf16.msra.mxu0 0
    %757 = vmatprep.subr.bf16.mxu0 0
    %758 = vmatpush1.bf16.msra.mxu0 0
    %759 = vmatprep.subr.bf16.mxu0 0
    %760 = vmatpush1.bf16.msra.mxu0 0
    %761 = vmatprep.mubr.bf16.mxu0 0
    %762 = vmatmul.mubr.bf16.gmra.mrb[0].mxu0 %v724
    %v763 = vpop.f32.mrb[0].mxu0
    %v764 = vadd.f32 %v709, %v763
    %v765 = vpop.f32.mrb[0].mxu0
    %v766 = vpop.f32.mrb[0].mxu0
    %v767 = vadd.f32 %v709, %v766
    %v768 = vpop.f32.mrb[0].mxu0
    %769 = vmatprep.mubr.bf16.mxu0 0
    %770 = vmatmul.mubr.bf16.gmra.mrb[0].mxu0 %v727
    %v771 = vpop.f32.mrb[0].mxu0
    %v772 = vadd.f32 %v709, %v771
    %v773 = vpop.f32.mrb[0].mxu0
    %v774 = vpop.f32.mrb[0].mxu0
    %v775 = vadd.f32 %v709, %v774
    %v776 = vpop.f32.mrb[0].mxu0
    %777 = vdwg.mxu0
    %v778 = vmul.f32 %v764, 0.5
    %v779 = vmul.f32 %v767, 0.5
    %v780 = vmul.f32 %v772, 0.5
    %v781 = vmul.f32 %v775, 0.5
    %v782 = vmul.f32 %v764, 0.044715
    %v783 = vmul.f32 %v767, 0.044715
    %v784 = vmul.f32 %v772, 0.044715
    %v785 = vmul.f32 %v775, 0.044715
    %v786 = vmul.f32 %v782, %v764
    %v787 = vmul.f32 %v783, %v767
    %v788 = vmul.f32 %v784, %v772
    %v789 = vmul.f32 %v785, %v775
    %v790 = vmul.f32 %v786, %v764
    %v791 = vmul.f32 %v787, %v767
    %v792 = vmul.f32 %v788, %v772
    %v793 = vmul.f32 %v789, %v775
    %v794 = vadd.f32 %v764, %v790
    %v795 = vadd.f32 %v767, %v791
    %v796 = vadd.f32 %v772, %v792
    %v797 = vadd.f32 %v775, %v793
    %v798 = vmul.f32 %v794, 0.7978846
    %v799 = vmul.f32 %v795, 0.7978846
    %v800 = vmul.f32 %v796, 0.7978846
    %v801 = vmul.f32 %v797, 0.7978846
    %v802 = vtanh.pop %v798
    %v803 = vtanh.pop %v799
    %v804 = vtanh.pop %v800
    %v805 = vtanh.pop %v801
    %v806 = vadd.f32 %v802, 1.0
    %v807 = vadd.f32 %v803, 1.0
    %v808 = vadd.f32 %v804, 1.0
    %v809 = vadd.f32 %v805, 1.0
    %v810 = vmul.f32 %v778, %v806
    %v811 = vmul.f32 %v779, %v807
    %v812 = vmul.f32 %v780, %v808
    %v813 = vmul.f32 %v781, %v809
    %v814 = vsel %vm360, %v810, 0.0
    %v815 = vsel %vm361, %v811, 0.0
    %v816 = vsel %vm360, %v812, 0.0
    %v817 = vsel %vm361, %v813, 0.0
    %v818 = vmul.f32 %v814, %v814
    %v819 = vmul.f32 %v815, %v815
    %v820 = vmul.f32 %v816, %v816
    %v821 = vmul.f32 %v817, %v817
    %v822 = vpack.c.bf16 %v819, %v818
    %v823 = vpack.c.bf16 %v821, %v820
    %v825 = vsel %vm614, %v118, 0
    %827 = vmatprep.subr.bf16.mxu0 0
    %828 = vmatpush1.bf16.msra.mxu0 %v822
    %829 = vmatprep.subr.bf16.mxu0 0
    %830 = vmatpush1.bf16.msra.mxu0 %v823
    %831 = vmatprep.subr.bf16.mxu0 0
    %832 = vmatpush1.bf16.msra.mxu0 0
    %833 = vmatprep.subr.bf16.mxu0 0
    %834 = vmatpush1.bf16.msra.mxu0 0
    %835 = vmatprep.subr.bf16.mxu0 0
    %836 = vmatpush1.bf16.msra.mxu0 0
    %837 = vmatprep.subr.bf16.mxu0 0
    %838 = vmatpush1.bf16.msra.mxu0 0
    %839 = vmatprep.subr.bf16.mxu0 0
    %840 = vmatpush1.bf16.msra.mxu0 0
    %841 = vmatprep.subr.bf16.mxu0 0
    %842 = vmatpush1.bf16.msra.mxu0 0
    %843 = vmatprep.subr.bf16.mxu0 0
    %844 = vmatpush1.bf16.msra.mxu0 0
    %845 = vmatprep.subr.bf16.mxu0 0
    %846 = vmatpush1.bf16.msra.mxu0 0
    %847 = vmatprep.subr.bf16.mxu0 0
    %848 = vmatpush1.bf16.msra.mxu0 0
    %849 = vmatprep.subr.bf16.mxu0 0
    %850 = vmatpush1.bf16.msra.mxu0 0
    %851 = vmatprep.subr.bf16.mxu0 0
    %852 = vmatpush1.bf16.msra.mxu0 0
    %853 = vmatprep.subr.bf16.mxu0 0
    %854 = vmatpush1.bf16.msra.mxu0 0
    %855 = vmatprep.subr.bf16.mxu0 0
    %856 = vmatpush1.bf16.msra.mxu0 0
    %857 = vmatprep.subr.bf16.mxu0 0
    %858 = vmatpush1.bf16.msra.mxu0 0
    %859 = vmatprep.mubr.bf16.mxu0 0
    %860 = vmatmul.mubr.bf16.gmra.mrb[0].mxu0 %v825
    %v861 = vpop.f32.mrb[0].mxu0
    %v862 = vadd.f32 0.0, %v861
    %v863 = vpop.f32.mrb[0].mxu0
    %v864 = vpop.f32.mrb[0].mxu0
    %v865 = vpop.f32.mrb[0].mxu0
    %866 = vdwg.mxu0
    %v867 = vrsqrt.pop %v862
    %v868 = vmul.f32 %v862, %v867
    %vm869 = vcmp.eq.f32.partialorder %v862, inf
    %v870 = vsel %vm869, %v862, %v868
    %vm871 = vcmp.eq.f32.partialorder %v862, 0.0
    %v872 = vand.u32 %v862, 2147483648
    %v873 = vsel %vm871, %v872, %v870
    %vm874 = vcmask 523264
    %v875 = vsel %vm874, %v873, 0.0
    %876 = vadd.xlane.f32.xlu0 %v875
    %v877 = vpop.xlane.xlu0 %876
    %v878 = vrcp.pop 64.0
    %v879 = vmul.f32 %v877, %v878
    %v880 = vadd.f32 %v879, 1e-06
    %v881 = vrcp.pop %v880
    %v882 = vmul.f32 %v873, %v881
    %v883 = vlaneseq
    %v884 = vshrl.u32 %v883, 7
    %v885 = vsub.s32 0, %v884
    %v886 = vrot.slane %v882, %v885
    %v887 = vlaneseq
    %v888 = vshrl.u32 %v887, 7
    %v889 = vsub.s32 1, %v888
    %v890 = vrot.slane %v882, %v889
    %v891 = vld [vmem:[%s10] sm:$0x1]
    %v892 = vmul.f32 %v814, %v886
    %v893 = vmul.f32 %v815, %v886
    %v894 = vmul.f32 %v816, %v890
    %v895 = vmul.f32 %v817, %v890
    %v897 = vlaneseq
    %v898 = vshrl.u32 %v897, 7
    %v899 = vsub.s32 0, %v898
    %v900 = vrot.slane %v891, %v899
    %v902 = vmul.f32 %v900, %v892
    %v903 = vmul.f32 %v900, %v893
    %v904 = vmul.f32 %v900, %v894
    %v905 = vmul.f32 %v900, %v895
    %v906 = vld [vmem:[%s11] sm:$0x1]
    %v908 = vlaneseq
    %v909 = vshrl.u32 %v908, 7
    %v910 = vsub.s32 0, %v909
    %v911 = vrot.slane %v906, %v910
    %v913 = vadd.f32 %v902, %v911
    %v914 = vadd.f32 %v903, %v911
    %v915 = vadd.f32 %v904, %v911
    %v916 = vadd.f32 %v905, %v911
    %v917 = vadd.f32 %v913, %v814
    %v918 = vadd.f32 %v914, %v815
    %v919 = vadd.f32 %v915, %v816
    %v920 = vadd.f32 %v916, %v817
    %v921 = vpack.c.bf16 %v918, %v917
    %v922 = vpack.c.bf16 %v920, %v919
    %v923 = vld [vmem:[%s12] sm:$0xf]
    %v924 = vld [vmem:[%s12 + $0x4] sm:$0xf]
    %v925 = vld [vmem:[%s12 + $0x8] sm:$0xf]
    %v926 = vld [vmem:[%s12 + $0xc] sm:$0xf]
    %v927 = vld [vmem:[%s12 + $0x10] sm:$0xf]
    %v928 = vld [vmem:[%s12 + $0x14] sm:$0xf]
    %v929 = vld [vmem:[%s12 + $0x18] sm:$0xf]
    %v930 = vld [vmem:[%s12 + $0x1c] sm:$0xf]
    %v939 = vunpack.c.l.b16 %v923
    %v940 = vunpack.c.l.b16 %v924
    %v941 = vunpack.c.l.b16 %v925
    %v942 = vunpack.c.l.b16 %v926
    %v943 = vunpack.c.l.b16 %v927
    %v944 = vunpack.c.l.b16 %v928
    %v945 = vunpack.c.l.b16 %v929
    %v946 = vunpack.c.l.b16 %v930
    %v947 = vpack.c.b16 %v940, %v939
    %v948 = vpack.c.b16 %v942, %v941
    %v949 = vpack.c.b16 %v944, %v943
    %v950 = vpack.c.b16 %v946, %v945
    %v956 = vsel %vm874, %v921, 0
    %v959 = vsel %vm874, %v922, 0
    %961 = vmatprep.subr.bf16.mxu0 0
    %962 = vmatpush1.bf16.msra.mxu0 %v947
    %963 = vmatprep.subr.bf16.mxu0 0
    %964 = vmatpush1.bf16.msra.mxu0 %v948
    %965 = vmatprep.subr.bf16.mxu0 0
    %966 = vmatpush1.bf16.msra.mxu0 %v949
    %967 = vmatprep.subr.bf16.mxu0 0
    %968 = vmatpush1.bf16.msra.mxu0 %v950
    %969 = vmatprep.subr.bf16.mxu0 0
    %970 = vmatpush1.bf16.msra.mxu0 0
    %971 = vmatprep.subr.bf16.mxu0 0
    %972 = vmatpush1.bf16.msra.mxu0 0
    %973 = vmatprep.subr.bf16.mxu0 0
    %974 = vmatpush1.bf16.msra.mxu0 0
    %975 = vmatprep.subr.bf16.mxu0 0
    %976 = vmatpush1.bf16.msra.mxu0 0
    %977 = vmatprep.subr.bf16.mxu0 0
    %978 = vmatpush1.bf16.msra.mxu0 0
    %979 = vmatprep.subr.bf16.mxu0 0
    %980 = vmatpush1.bf16.msra.mxu0 0
    %981 = vmatprep.subr.bf16.mxu0 0
    %982 = vmatpush1.bf16.msra.mxu0 0
    %983 = vmatprep.subr.bf16.mxu0 0
    %984 = vmatpush1.bf16.msra.mxu0 0
    %985 = vmatprep.subr.bf16.mxu0 0
    %986 = vmatpush1.bf16.msra.mxu0 0
    %987 = vmatprep.subr.bf16.mxu0 0
    %988 = vmatpush1.bf16.msra.mxu0 0
    %989 = vmatprep.subr.bf16.mxu0 0
    %990 = vmatpush1.bf16.msra.mxu0 0
    %991 = vmatprep.subr.bf16.mxu0 0
    %992 = vmatpush1.bf16.msra.mxu0 0
    %993 = vmatprep.mubr.bf16.mxu0 0
    %994 = vmatmul.mubr.bf16.gmra.mrb[0].mxu0 %v956
    %v995 = vpop.f32.mrb[0].mxu0
    %v996 = vadd.f32 0.0, %v995
    %v997 = vpop.f32.mrb[0].mxu0
    %v998 = vpop.f32.mrb[0].mxu0
    %v999 = vadd.f32 0.0, %v998
    %v1000 = vpop.f32.mrb[0].mxu0
    %1001 = vmatprep.mubr.bf16.mxu0 0
    %1002 = vmatmul.mubr.bf16.gmra.mrb[0].mxu0 %v959
    %v1003 = vpop.f32.mrb[0].mxu0
    %v1004 = vadd.f32 0.0, %v1003
    %v1005 = vpop.f32.mrb[0].mxu0
    %v1006 = vpop.f32.mrb[0].mxu0
    %v1007 = vadd.f32 0.0, %v1006
    %v1008 = vpop.f32.mrb[0].mxu0
    %1009 = vdwg.mxu0
    %v1010 = vadd.f32 %v362, %v996
    %v1011 = vadd.f32 %v363, %v999
    %v1012 = vadd.f32 %v364, %v1004
    %v1013 = vadd.f32 %v365, %v1007
    %v1014 = vld [vmem:[%s13] sm:$0x1]
    %v1016 = vlaneseq
    %v1017 = vshrl.u32 %v1016, 7
    %v1018 = vsub.s32 0, %v1017
    %v1019 = vrot.slane %v1014, %v1018
    %v1021 = vadd.f32 %v1010, %v1019
    %v1022 = vadd.f32 %v1011, %v1019
    %v1023 = vadd.f32 %v1012, %v1019
    %v1024 = vadd.f32 %v1013, %v1019
    %v1025 = vsel %vm360, %v1021, 0.0
    %v1026 = vsel %vm361, %v1022, 0.0
    %v1027 = vsel %vm360, %v1023, 0.0
    %v1028 = vsel %vm361, %v1024, 0.0
    %s1029 = scalar_lea.vmem %s4, 8
    %v1030 = vld [vmem:[%s1029] sm:$0x7f]
    %v1031 = vrot.slane %v1025, 5
    %v1032 = vrot.slane %v1026, 5
    %v1033 = vrot.slane %v1027, 5
    %v1034 = vrot.slane %v1028, 5
    %v1035 = vsel %vm371, %v1033, %v1034
    %v1036 = vsel %vm371, %v1032, %v1033
    %v1037 = vsel %vm371, %v1031, %v1032
    %v1038 = vsel %vm371, %v1034, %v1031
    %v1039 = vsel %vm384, %v1038, 0.0
    %v1040 = vsel %vm385, %v1037, 0.0
    %v1041 = vsel %vm384, %v1036, 0.0
    %v1042 = vsel %vm385, %v1035, 0.0
    %v1043 = vlaneseq
    %v1044 = vshrl.u32 %v1043, 7
    %v1045 = vsub.s32 0, %v1044
    %v1046 = vrot.slane %v1030, %v1045
    %v1047 = vmul.f32 %v1039, %v1046
    %v1048 = vmul.f32 %v1040, %v1046
    %v1049 = vmul.f32 %v1041, %v1046
    %v1050 = vmul.f32 %v1042, %v1046
    %v1051 = vadd.f32 %v1047, 0.0
    %v1052 = vadd.f32 %v1048, 0.0
    %v1053 = vadd.f32 %v1049, 0.0
    %v1054 = vadd.f32 %v1050, 0.0
    %v1055 = vrot.slane %v1025, 6
    %v1056 = vrot.slane %v1026, 6
    %v1057 = vrot.slane %v1027, 6
    %v1058 = vrot.slane %v1028, 6
    %v1059 = vsel %vm406, %v1057, %v1058
    %v1060 = vsel %vm406, %v1056, %v1057
    %v1061 = vsel %vm406, %v1055, %v1056
    %v1062 = vsel %vm406, %v1058, %v1055
    %v1063 = vsel %vm419, %v1062, 0.0
    %v1064 = vsel %vm420, %v1061, 0.0
    %v1065 = vsel %vm419, %v1060, 0.0
    %v1066 = vsel %vm420, %v1059, 0.0
    %v1067 = vlaneseq
    %v1068 = vshrl.u32 %v1067, 7
    %v1069 = vsub.s32 1, %v1068
    %v1070 = vrot.slane %v1030, %v1069
    %v1071 = vmul.f32 %v1063, %v1070
    %v1072 = vmul.f32 %v1064, %v1070
    %v1073 = vmul.f32 %v1065, %v1070
    %v1074 = vmul.f32 %v1066, %v1070
    %v1075 = vadd.f32 %v1051, %v1071
    %v1076 = vadd.f32 %v1052, %v1072
    %v1077 = vadd.f32 %v1053, %v1073
    %v1078 = vadd.f32 %v1054, %v1074
    %v1079 = vrot.slane %v1025, 7
    %v1080 = vrot.slane %v1026, 7
    %v1081 = vrot.slane %v1027, 7
    %v1082 = vrot.slane %v1028, 7
    %v1083 = vsel %vm441, %v1081, %v1082
    %v1084 = vsel %vm441, %v1080, %v1081
    %v1085 = vsel %vm441, %v1079, %v1080
    %v1086 = vsel %vm441, %v1082, %v1079
    %v1087 = vsel %vm454, %v1086, 0.0
    %v1088 = vsel %vm455, %v1085, 0.0
    %v1089 = vsel %vm454, %v1084, 0.0
    %v1090 = vsel %vm455, %v1083, 0.0
    %v1091 = vlaneseq
    %v1092 = vshrl.u32 %v1091, 7
    %v1093 = vsub.s32 2, %v1092
    %v1094 = vrot.slane %v1030, %v1093
    %v1095 = vmul.f32 %v1087, %v1094
    %v1096 = vmul.f32 %v1088, %v1094
    %v1097 = vmul.f32 %v1089, %v1094
    %v1098 = vmul.f32 %v1090, %v1094
    %v1099 = vadd.f32 %v1075, %v1095
    %v1100 = vadd.f32 %v1076, %v1096
    %v1101 = vadd.f32 %v1077, %v1097
    %v1102 = vadd.f32 %v1078, %v1098
    %v1103 = vsel %vm480, %v1025, 0.0
    %v1104 = vsel %vm481, %v1026, 0.0
    %v1105 = vsel %vm480, %v1027, 0.0
    %v1106 = vsel %vm481, %v1028, 0.0
    %v1107 = vlaneseq
    %v1108 = vshrl.u32 %v1107, 7
    %v1109 = vsub.s32 3, %v1108
    %v1110 = vrot.slane %v1030, %v1109
    %v1111 = vmul.f32 %v1103, %v1110
    %v1112 = vmul.f32 %v1104, %v1110
    %v1113 = vmul.f32 %v1105, %v1110
    %v1114 = vmul.f32 %v1106, %v1110
    %v1115 = vadd.f32 %v1099, %v1111
    %v1116 = vadd.f32 %v1100, %v1112
    %v1117 = vadd.f32 %v1101, %v1113
    %v1118 = vadd.f32 %v1102, %v1114
    %v1119 = vrot.slane %v1025, 1
    %v1120 = vrot.slane %v1026, 1
    %v1121 = vrot.slane %v1027, 1
    %v1122 = vrot.slane %v1028, 1
    %v1123 = vsel %vm502, %v1121, %v1122
    %v1124 = vsel %vm502, %v1120, %v1121
    %v1125 = vsel %vm502, %v1119, %v1120
    %v1126 = vsel %vm502, %v1122, %v1119
    %v1127 = vsel %vm515, %v1125, 0.0
    %v1128 = vsel %vm516, %v1124, 0.0
    %v1129 = vsel %vm515, %v1123, 0.0
    %v1130 = vsel %vm516, %v1126, 0.0
    %v1131 = vlaneseq
    %v1132 = vshrl.u32 %v1131, 7
    %v1133 = vsub.s32 4, %v1132
    %v1134 = vrot.slane %v1030, %v1133
    %v1135 = vmul.f32 %v1127, %v1134
    %v1136 = vmul.f32 %v1128, %v1134
    %v1137 = vmul.f32 %v1129, %v1134
    %v1138 = vmul.f32 %v1130, %v1134
    %v1139 = vadd.f32 %v1115, %v1135
    %v1140 = vadd.f32 %v1116, %v1136
    %v1141 = vadd.f32 %v1117, %v1137
    %v1142 = vadd.f32 %v1118, %v1138
    %v1143 = vrot.slane %v1025, 2
    %v1144 = vrot.slane %v1026, 2
    %v1145 = vrot.slane %v1027, 2
    %v1146 = vrot.slane %v1028, 2
    %v1147 = vsel %vm537, %v1145, %v1146
    %v1148 = vsel %vm537, %v1144, %v1145
    %v1149 = vsel %vm537, %v1143, %v1144
    %v1150 = vsel %vm537, %v1146, %v1143
    %v1151 = vsel %vm550, %v1149, 0.0
    %v1152 = vsel %vm551, %v1148, 0.0
    %v1153 = vsel %vm550, %v1147, 0.0
    %v1154 = vsel %vm551, %v1150, 0.0
    %v1155 = vlaneseq
    %v1156 = vshrl.u32 %v1155, 7
    %v1157 = vsub.s32 5, %v1156
    %v1158 = vrot.slane %v1030, %v1157
    %v1159 = vmul.f32 %v1151, %v1158
    %v1160 = vmul.f32 %v1152, %v1158
    %v1161 = vmul.f32 %v1153, %v1158
    %v1162 = vmul.f32 %v1154, %v1158
    %v1163 = vadd.f32 %v1139, %v1159
    %v1164 = vadd.f32 %v1140, %v1160
    %v1165 = vadd.f32 %v1141, %v1161
    %v1166 = vadd.f32 %v1142, %v1162
    %v1167 = vrot.slane %v1025, 3
    %v1168 = vrot.slane %v1026, 3
    %v1169 = vrot.slane %v1027, 3
    %v1170 = vrot.slane %v1028, 3
    %v1171 = vsel %vm572, %v1169, %v1170
    %v1172 = vsel %vm572, %v1168, %v1169
    %v1173 = vsel %vm572, %v1167, %v1168
    %v1174 = vsel %vm572, %v1170, %v1167
    %v1175 = vsel %vm585, %v1173, 0.0
    %v1176 = vsel %vm586, %v1172, 0.0
    %v1177 = vsel %vm585, %v1171, 0.0
    %v1178 = vsel %vm586, %v1174, 0.0
    %v1179 = vlaneseq
    %v1180 = vshrl.u32 %v1179, 7
    %v1181 = vsub.s32 6, %v1180
    %v1182 = vrot.slane %v1030, %v1181
    %v1183 = vmul.f32 %v1175, %v1182
    %v1184 = vmul.f32 %v1176, %v1182
    %v1185 = vmul.f32 %v1177, %v1182
    %v1186 = vmul.f32 %v1178, %v1182
    %v1187 = vadd.f32 %v1163, %v1183
    %v1188 = vadd.f32 %v1164, %v1184
    %v1189 = vadd.f32 %v1165, %v1185
    %v1190 = vadd.f32 %v1166, %v1186
    %s1191 = scalar_lea.vmem %s5, 1
    %v1192 = vld [vmem:[%s1191] sm:$0x1]
    %v1194 = vlaneseq
    %v1195 = vshrl.u32 %v1194, 7
    %v1196 = vsub.s32 0, %v1195
    %v1197 = vrot.slane %v1192, %v1196
    %v1199 = vadd.f32 %v1187, %v1197
    %v1200 = vadd.f32 %v1188, %v1197
    %v1201 = vadd.f32 %v1189, %v1197
    %v1202 = vadd.f32 %v1190, %v1197
    %v1203 = vsel %vm614, %v1199, 0.0
    %1204 = vadd.xlane.f32.xlu0 %v1203
    %v1205 = vpop.xlane.xlu0 %1204
    %v1206 = vsel %vm614, %v1200, 0.0
    %1207 = vadd.xlane.f32.xlu0 %v1206
    %v1208 = vpop.xlane.xlu0 %1207
    %v1209 = vsel %vm614, %v1201, 0.0
    %1210 = vadd.xlane.f32.xlu0 %v1209
    %v1211 = vpop.xlane.xlu0 %1210
    %v1212 = vsel %vm614, %v1202, 0.0
    %1213 = vadd.xlane.f32.xlu0 %v1212
    %v1214 = vpop.xlane.xlu0 %1213
    %v1215 = vmul.f32 %v1205, %v627
    %v1216 = vmul.f32 %v1208, %v627
    %v1217 = vmul.f32 %v1211, %v627
    %v1218 = vmul.f32 %v1214, %v627
    %v1219 = vmul.f32 %v1199, %v1199
    %v1220 = vmul.f32 %v1200, %v1200
    %v1221 = vmul.f32 %v1201, %v1201
    %v1222 = vmul.f32 %v1202, %v1202
    %v1223 = vsel %vm614, %v1219, 0.0
    %1224 = vadd.xlane.f32.xlu0 %v1223
    %v1225 = vpop.xlane.xlu0 %1224
    %v1226 = vsel %vm614, %v1220, 0.0
    %1227 = vadd.xlane.f32.xlu0 %v1226
    %v1228 = vpop.xlane.xlu0 %1227
    %v1229 = vsel %vm614, %v1221, 0.0
    %1230 = vadd.xlane.f32.xlu0 %v1229
    %v1231 = vpop.xlane.xlu0 %1230
    %v1232 = vsel %vm614, %v1222, 0.0
    %1233 = vadd.xlane.f32.xlu0 %v1232
    %v1234 = vpop.xlane.xlu0 %1233
    %v1235 = vmul.f32 %v1225, %v627
    %v1236 = vmul.f32 %v1228, %v627
    %v1237 = vmul.f32 %v1231, %v627
    %v1238 = vmul.f32 %v1234, %v627
    %v1239 = vmul.f32 %v1215, %v1215
    %v1240 = vmul.f32 %v1216, %v1216
    %v1241 = vmul.f32 %v1217, %v1217
    %v1242 = vmul.f32 %v1218, %v1218
    %v1243 = vsub.f32 %v1235, %v1239
    %v1244 = vsub.f32 %v1236, %v1240
    %v1245 = vsub.f32 %v1237, %v1241
    %v1246 = vsub.f32 %v1238, %v1242
    %v1247 = vsub.f32 %v1199, %v1215
    %v1248 = vsub.f32 %v1200, %v1216
    %v1249 = vsub.f32 %v1201, %v1217
    %v1250 = vsub.f32 %v1202, %v1218
    %v1251 = vadd.f32 %v1243, 1e-06
    %v1252 = vadd.f32 %v1244, 1e-06
    %v1253 = vadd.f32 %v1245, 1e-06
    %v1254 = vadd.f32 %v1246, 1e-06
    %v1255 = vrsqrt.pop %v1251
    %v1256 = vrsqrt.pop %v1252
    %v1257 = vrsqrt.pop %v1253
    %v1258 = vrsqrt.pop %v1254
    %v1259 = vmul.f32 %v1247, %v1255
    %v1260 = vmul.f32 %v1248, %v1256
    %v1261 = vmul.f32 %v1249, %v1257
    %v1262 = vmul.f32 %v1250, %v1258
    %s1263 = scalar_lea.vmem %s6, 1
    %v1264 = vld [vmem:[%s1263] sm:$0x1]
    %v1266 = vlaneseq
    %v1267 = vshrl.u32 %v1266, 7
    %v1268 = vsub.s32 0, %v1267
    %v1269 = vrot.slane %v1264, %v1268
    %v1271 = vmul.f32 %v1259, %v1269
    %v1272 = vmul.f32 %v1260, %v1269
    %v1273 = vmul.f32 %v1261, %v1269
    %v1274 = vmul.f32 %v1262, %v1269
    %s1275 = scalar_lea.vmem %s7, 1
    %v1276 = vld [vmem:[%s1275] sm:$0x1]
    %v1278 = vlaneseq
    %v1279 = vshrl.u32 %v1278, 7
    %v1280 = vsub.s32 0, %v1279
    %v1281 = vrot.slane %v1276, %v1280
    %v1283 = vadd.f32 %v1271, %v1281
    %v1284 = vadd.f32 %v1272, %v1281
    %v1285 = vadd.f32 %v1273, %v1281
    %v1286 = vadd.f32 %v1274, %v1281
    %v1287 = vpack.c.bf16 %v1284, %v1283
    %v1288 = vpack.c.bf16 %v1286, %v1285
    %s1289 = scalar_lea.vmem %s8, 16
    %v1290 = vld [vmem:[%s1289] sm:$0xf]
    %v1291 = vld [vmem:[%s1289 + $0x4] sm:$0xf]
    %v1292 = vld [vmem:[%s1289 + $0x8] sm:$0xf]
    %v1293 = vld [vmem:[%s1289 + $0xc] sm:$0xf]
    %s1294 = scalar_lea.vmem %s9, 1
    %v1295 = vld [vmem:[%s1294] sm:$0x1]
    %v1297 = vlaneseq
    %v1298 = vshrl.u32 %v1297, 7
    %v1299 = vsub.s32 0, %v1298
    %v1300 = vrot.slane %v1295, %v1299
    %v1306 = vunpack.c.l.b16 %v1290
    %v1307 = vunpack.c.l.b16 %v1291
    %v1308 = vunpack.c.l.b16 %v1292
    %v1309 = vunpack.c.l.b16 %v1293
    %v1310 = vpack.c.b16 %v1307, %v1306
    %v1311 = vpack.c.b16 %v1309, %v1308
    %v1315 = vsel %vm614, %v1287, 0
    %v1318 = vsel %vm614, %v1288, 0
    %1320 = vmatprep.subr.bf16.mxu0 0
    %1321 = vmatpush1.bf16.msra.mxu0 %v1310
    %1322 = vmatprep.subr.bf16.mxu0 0
    %1323 = vmatpush1.bf16.msra.mxu0 %v1311
    %1324 = vmatprep.subr.bf16.mxu0 0
    %1325 = vmatpush1.bf16.msra.mxu0 0
    %1326 = vmatprep.subr.bf16.mxu0 0
    %1327 = vmatpush1.bf16.msra.mxu0 0
    %1328 = vmatprep.subr.bf16.mxu0 0
    %1329 = vmatpush1.bf16.msra.mxu0 0
    %1330 = vmatprep.subr.bf16.mxu0 0
    %1331 = vmatpush1.bf16.msra.mxu0 0
    %1332 = vmatprep.subr.bf16.mxu0 0
    %1333 = vmatpush1.bf16.msra.mxu0 0
    %1334 = vmatprep.subr.bf16.mxu0 0
    %1335 = vmatpush1.bf16.msra.mxu0 0
    %1336 = vmatprep.subr.bf16.mxu0 0
    %1337 = vmatpush1.bf16.msra.mxu0 0
    %1338 = vmatprep.subr.bf16.mxu0 0
    %1339 = vmatpush1.bf16.msra.mxu0 0
    %1340 = vmatprep.subr.bf16.mxu0 0
    %1341 = vmatpush1.bf16.msra.mxu0 0
    %1342 = vmatprep.subr.bf16.mxu0 0
    %1343 = vmatpush1.bf16.msra.mxu0 0
    %1344 = vmatprep.subr.bf16.mxu0 0
    %1345 = vmatpush1.bf16.msra.mxu0 0
    %1346 = vmatprep.subr.bf16.mxu0 0
    %1347 = vmatpush1.bf16.msra.mxu0 0
    %1348 = vmatprep.subr.bf16.mxu0 0
    %1349 = vmatpush1.bf16.msra.mxu0 0
    %1350 = vmatprep.subr.bf16.mxu0 0
    %1351 = vmatpush1.bf16.msra.mxu0 0
    %1352 = vmatprep.mubr.bf16.mxu0 0
    %1353 = vmatmul.mubr.bf16.gmra.mrb[0].mxu0 %v1315
    %v1354 = vpop.f32.mrb[0].mxu0
    %v1355 = vadd.f32 %v1300, %v1354
    %v1356 = vpop.f32.mrb[0].mxu0
    %v1357 = vpop.f32.mrb[0].mxu0
    %v1358 = vadd.f32 %v1300, %v1357
    %v1359 = vpop.f32.mrb[0].mxu0
    %1360 = vmatprep.mubr.bf16.mxu0 0
    %1361 = vmatmul.mubr.bf16.gmra.mrb[0].mxu0 %v1318
    %v1362 = vpop.f32.mrb[0].mxu0
    %v1363 = vadd.f32 %v1300, %v1362
    %v1364 = vpop.f32.mrb[0].mxu0
    %v1365 = vpop.f32.mrb[0].mxu0
    %v1366 = vadd.f32 %v1300, %v1365
    %v1367 = vpop.f32.mrb[0].mxu0
    %1368 = vdwg.mxu0
    %v1369 = vmul.f32 %v1355, 0.5
    %v1370 = vmul.f32 %v1358, 0.5
    %v1371 = vmul.f32 %v1363, 0.5
    %v1372 = vmul.f32 %v1366, 0.5
    %v1373 = vmul.f32 %v1355, 0.044715
    %v1374 = vmul.f32 %v1358, 0.044715
    %v1375 = vmul.f32 %v1363, 0.044715
    %v1376 = vmul.f32 %v1366, 0.044715
    %v1377 = vmul.f32 %v1373, %v1355
    %v1378 = vmul.f32 %v1374, %v1358
    %v1379 = vmul.f32 %v1375, %v1363
    %v1380 = vmul.f32 %v1376, %v1366
    %v1381 = vmul.f32 %v1377, %v1355
    %v1382 = vmul.f32 %v1378, %v1358
    %v1383 = vmul.f32 %v1379, %v1363
    %v1384 = vmul.f32 %v1380, %v1366
    %v1385 = vadd.f32 %v1355, %v1381
    %v1386 = vadd.f32 %v1358, %v1382
    %v1387 = vadd.f32 %v1363, %v1383
    %v1388 = vadd.f32 %v1366, %v1384
    %v1389 = vmul.f32 %v1385, 0.7978846
    %v1390 = vmul.f32 %v1386, 0.7978846
    %v1391 = vmul.f32 %v1387, 0.7978846
    %v1392 = vmul.f32 %v1388, 0.7978846
    %v1393 = vtanh.pop %v1389
    %v1394 = vtanh.pop %v1390
    %v1395 = vtanh.pop %v1391
    %v1396 = vtanh.pop %v1392
    %v1397 = vadd.f32 %v1393, 1.0
    %v1398 = vadd.f32 %v1394, 1.0
    %v1399 = vadd.f32 %v1395, 1.0
    %v1400 = vadd.f32 %v1396, 1.0
    %v1401 = vmul.f32 %v1369, %v1397
    %v1402 = vmul.f32 %v1370, %v1398
    %v1403 = vmul.f32 %v1371, %v1399
    %v1404 = vmul.f32 %v1372, %v1400
    %v1405 = vsel %vm360, %v1401, 0.0
    %v1406 = vsel %vm361, %v1402, 0.0
    %v1407 = vsel %vm360, %v1403, 0.0
    %v1408 = vsel %vm361, %v1404, 0.0
    %v1409 = vmul.f32 %v1405, %v1405
    %v1410 = vmul.f32 %v1406, %v1406
    %v1411 = vmul.f32 %v1407, %v1407
    %v1412 = vmul.f32 %v1408, %v1408
    %v1413 = vpack.c.bf16 %v1410, %v1409
    %v1414 = vpack.c.bf16 %v1412, %v1411
    %1415 = vmatprep.subr.bf16.mxu0 0
    %1416 = vmatpush1.bf16.msra.mxu0 %v1413
    %1417 = vmatprep.subr.bf16.mxu0 0
    %1418 = vmatpush1.bf16.msra.mxu0 %v1414
    %1419 = vmatprep.subr.bf16.mxu0 0
    %1420 = vmatpush1.bf16.msra.mxu0 0
    %1421 = vmatprep.subr.bf16.mxu0 0
    %1422 = vmatpush1.bf16.msra.mxu0 0
    %1423 = vmatprep.subr.bf16.mxu0 0
    %1424 = vmatpush1.bf16.msra.mxu0 0
    %1425 = vmatprep.subr.bf16.mxu0 0
    %1426 = vmatpush1.bf16.msra.mxu0 0
    %1427 = vmatprep.subr.bf16.mxu0 0
    %1428 = vmatpush1.bf16.msra.mxu0 0
    %1429 = vmatprep.subr.bf16.mxu0 0
    %1430 = vmatpush1.bf16.msra.mxu0 0
    %1431 = vmatprep.subr.bf16.mxu0 0
    %1432 = vmatpush1.bf16.msra.mxu0 0
    %1433 = vmatprep.subr.bf16.mxu0 0
    %1434 = vmatpush1.bf16.msra.mxu0 0
    %1435 = vmatprep.subr.bf16.mxu0 0
    %1436 = vmatpush1.bf16.msra.mxu0 0
    %1437 = vmatprep.subr.bf16.mxu0 0
    %1438 = vmatpush1.bf16.msra.mxu0 0
    %1439 = vmatprep.subr.bf16.mxu0 0
    %1440 = vmatpush1.bf16.msra.mxu0 0
    %1441 = vmatprep.subr.bf16.mxu0 0
    %1442 = vmatpush1.bf16.msra.mxu0 0
    %1443 = vmatprep.subr.bf16.mxu0 0
    %1444 = vmatpush1.bf16.msra.mxu0 0
    %1445 = vmatprep.subr.bf16.mxu0 0
    %1446 = vmatpush1.bf16.msra.mxu0 0
    %1447 = vmatprep.mubr.bf16.mxu0 0
    %1448 = vmatmul.mubr.bf16.gmra.mrb[0].mxu0 %v825
    %v1449 = vpop.f32.mrb[0].mxu0
    %v1450 = vadd.f32 0.0, %v1449
    %v1451 = vpop.f32.mrb[0].mxu0
    %v1452 = vpop.f32.mrb[0].mxu0
    %v1453 = vpop.f32.mrb[0].mxu0
    %1454 = vdwg.mxu0
    %v1455 = vrsqrt.pop %v1450
    %v1456 = vmul.f32 %v1450, %v1455
    %vm1457 = vcmp.eq.f32.partialorder %v1450, inf
    %v1458 = vsel %vm1457, %v1450, %v1456
    %vm1459 = vcmp.eq.f32.partialorder %v1450, 0.0
    %v1460 = vand.u32 %v1450, 2147483648
    %v1461 = vsel %vm1459, %v1460, %v1458
    %v1462 = vsel %vm874, %v1461, 0.0
    %1463 = vadd.xlane.f32.xlu0 %v1462
    %v1464 = vpop.xlane.xlu0 %1463
    %v1465 = vmul.f32 %v1464, %v878
    %v1466 = vadd.f32 %v1465, 1e-06
    %v1467 = vrcp.pop %v1466
    %v1468 = vmul.f32 %v1461, %v1467
    %v1469 = vlaneseq
    %v1470 = vshrl.u32 %v1469, 7
    %v1471 = vsub.s32 0, %v1470
    %v1472 = vrot.slane %v1468, %v1471
    %v1473 = vlaneseq
    %v1474 = vshrl.u32 %v1473, 7
    %v1475 = vsub.s32 1, %v1474
    %v1476 = vrot.slane %v1468, %v1475
    %s1477 = scalar_lea.vmem %s10, 1
    %v1478 = vld [vmem:[%s1477] sm:$0x1]
    %v1479 = vmul.f32 %v1405, %v1472
    %v1480 = vmul.f32 %v1406, %v1472
    %v1481 = vmul.f32 %v1407, %v1476
    %v1482 = vmul.f32 %v1408, %v1476
    %v1484 = vlaneseq
    %v1485 = vshrl.u32 %v1484, 7
    %v1486 = vsub.s32 0, %v1485
    %v1487 = vrot.slane %v1478, %v1486
    %v1489 = vmul.f32 %v1487, %v1479
    %v1490 = vmul.f32 %v1487, %v1480
    %v1491 = vmul.f32 %v1487, %v1481
    %v1492 = vmul.f32 %v1487, %v1482
    %s1493 = scalar_lea.vmem %s11, 1
    %v1494 = vld [vmem:[%s1493] sm:$0x1]
    %v1496 = vlaneseq
    %v1497 = vshrl.u32 %v1496, 7
    %v1498 = vsub.s32 0, %v1497
    %v1499 = vrot.slane %v1494, %v1498
    %v1501 = vadd.f32 %v1489, %v1499
    %v1502 = vadd.f32 %v1490, %v1499
    %v1503 = vadd.f32 %v1491, %v1499
    %v1504 = vadd.f32 %v1492, %v1499
    %v1505 = vadd.f32 %v1501, %v1405
    %v1506 = vadd.f32 %v1502, %v1406
    %v1507 = vadd.f32 %v1503, %v1407
    %v1508 = vadd.f32 %v1504, %v1408
    %v1509 = vpack.c.bf16 %v1506, %v1505
    %v1510 = vpack.c.bf16 %v1508, %v1507
    %s1511 = scalar_lea.vmem %s12, 32
    %v1512 = vld [vmem:[%s1511] sm:$0xf]
    %v1513 = vld [vmem:[%s1511 + $0x4] sm:$0xf]
    %v1514 = vld [vmem:[%s1511 + $0x8] sm:$0xf]
    %v1515 = vld [vmem:[%s1511 + $0xc] sm:$0xf]
    %v1516 = vld [vmem:[%s1511 + $0x10] sm:$0xf]
    %v1517 = vld [vmem:[%s1511 + $0x14] sm:$0xf]
    %v1518 = vld [vmem:[%s1511 + $0x18] sm:$0xf]
    %v1519 = vld [vmem:[%s1511 + $0x1c] sm:$0xf]
    %v1528 = vunpack.c.l.b16 %v1512
    %v1529 = vunpack.c.l.b16 %v1513
    %v1530 = vunpack.c.l.b16 %v1514
    %v1531 = vunpack.c.l.b16 %v1515
    %v1532 = vunpack.c.l.b16 %v1516
    %v1533 = vunpack.c.l.b16 %v1517
    %v1534 = vunpack.c.l.b16 %v1518
    %v1535 = vunpack.c.l.b16 %v1519
    %v1536 = vpack.c.b16 %v1529, %v1528
    %v1537 = vpack.c.b16 %v1531, %v1530
    %v1538 = vpack.c.b16 %v1533, %v1532
    %v1539 = vpack.c.b16 %v1535, %v1534
    %v1545 = vsel %vm874, %v1509, 0
    %v1548 = vsel %vm874, %v1510, 0
    %1550 = vmatprep.subr.bf16.mxu0 0
    %1551 = vmatpush1.bf16.msra.mxu0 %v1536
    %1552 = vmatprep.subr.bf16.mxu0 0
    %1553 = vmatpush1.bf16.msra.mxu0 %v1537
    %1554 = vmatprep.subr.bf16.mxu0 0
    %1555 = vmatpush1.bf16.msra.mxu0 %v1538
    %1556 = vmatprep.subr.bf16.mxu0 0
    %1557 = vmatpush1.bf16.msra.mxu0 %v1539
    %1558 = vmatprep.subr.bf16.mxu0 0
    %1559 = vmatpush1.bf16.msra.mxu0 0
    %1560 = vmatprep.subr.bf16.mxu0 0
    %1561 = vmatpush1.bf16.msra.mxu0 0
    %1562 = vmatprep.subr.bf16.mxu0 0
    %1563 = vmatpush1.bf16.msra.mxu0 0
    %1564 = vmatprep.subr.bf16.mxu0 0
    %1565 = vmatpush1.bf16.msra.mxu0 0
    %1566 = vmatprep.subr.bf16.mxu0 0
    %1567 = vmatpush1.bf16.msra.mxu0 0
    %1568 = vmatprep.subr.bf16.mxu0 0
    %1569 = vmatpush1.bf16.msra.mxu0 0
    %1570 = vmatprep.subr.bf16.mxu0 0
    %1571 = vmatpush1.bf16.msra.mxu0 0
    %1572 = vmatprep.subr.bf16.mxu0 0
    %1573 = vmatpush1.bf16.msra.mxu0 0
    %1574 = vmatprep.subr.bf16.mxu0 0
    %1575 = vmatpush1.bf16.msra.mxu0 0
    %1576 = vmatprep.subr.bf16.mxu0 0
    %1577 = vmatpush1.bf16.msra.mxu0 0
    %1578 = vmatprep.subr.bf16.mxu0 0
    %1579 = vmatpush1.bf16.msra.mxu0 0
    %1580 = vmatprep.subr.bf16.mxu0 0
    %1581 = vmatpush1.bf16.msra.mxu0 0
    %1582 = vmatprep.mubr.bf16.mxu0 0
    %1583 = vmatmul.mubr.bf16.gmra.mrb[0].mxu0 %v1545
    %v1584 = vpop.f32.mrb[0].mxu0
    %v1585 = vadd.f32 0.0, %v1584
    %v1586 = vpop.f32.mrb[0].mxu0
    %v1587 = vpop.f32.mrb[0].mxu0
    %v1588 = vadd.f32 0.0, %v1587
    %v1589 = vpop.f32.mrb[0].mxu0
    %1590 = vmatprep.mubr.bf16.mxu0 0
    %1591 = vmatmul.mubr.bf16.gmra.mrb[0].mxu0 %v1548
    %v1592 = vpop.f32.mrb[0].mxu0
    %v1593 = vadd.f32 0.0, %v1592
    %v1594 = vpop.f32.mrb[0].mxu0
    %v1595 = vpop.f32.mrb[0].mxu0
    %v1596 = vadd.f32 0.0, %v1595
    %v1597 = vpop.f32.mrb[0].mxu0
    %1598 = vdwg.mxu0
    %v1599 = vadd.f32 %v1025, %v1585
    %v1600 = vadd.f32 %v1026, %v1588
    %v1601 = vadd.f32 %v1027, %v1593
    %v1602 = vadd.f32 %v1028, %v1596
    %s1603 = scalar_lea.vmem %s13, 1
    %v1604 = vld [vmem:[%s1603] sm:$0x1]
    %v1606 = vlaneseq
    %v1607 = vshrl.u32 %v1606, 7
    %v1608 = vsub.s32 0, %v1607
    %v1609 = vrot.slane %v1604, %v1608
    %v1611 = vadd.f32 %v1599, %v1609
    %v1612 = vadd.f32 %v1600, %v1609
    %v1613 = vadd.f32 %v1601, %v1609
    %v1614 = vadd.f32 %v1602, %v1609
    %v1615 = vsel %vm360, %v1611, 0.0
    %v1616 = vsel %vm361, %v1612, 0.0
    %v1617 = vsel %vm360, %v1613, 0.0
    %v1618 = vsel %vm361, %v1614, 0.0
    %1619 = vst.msk [vmem:[#allocation4] sm:$0xff] %vm614, %v1615
    %1620 = vst.msk [vmem:[#allocation4 + $0x8] sm:$0xff] %vm614, %v1616
    %s1621 = scalar_lea.vmem [#allocation4], 16
    %1622 = vst.msk [vmem:[%s1621] sm:$0xff] %vm614, %v1617
    %1623 = vst.msk [vmem:[%s1621 + $0x8] sm:$0xff] %vm614, %v1618
    // Predicated region
    $region54: #{tpu_custom_call.1} parent=1 // pred_check
      _
    $region55: #{tpu_custom_call.1} parent=1 // pred_check_branch
      %1625 = sbr.rel (0) target = $region57
    $region56: #{tpu_custom_call.1} parent=1 // pred_region
      %s1627 = ssub.s32 512, 512
      %1628 = vsyncadd [#allocation5], %s1627
      %s1629 = sshll.u32 [#allocation4], 4
      %s1630 = int_to_ptr.vmem [resolvable:$true] %s1629
      %1635 = dma.vmem_to_hbm [thread:$0]  %s1630, 512, %s14, [#allocation5], 128, 128, 8
    $region57: #{tpu_custom_call.1} parent=1 // pred_fallthru
      _
    // Predicated region
    $region58: #{tpu_custom_call.1} parent=1 // pred_check
      _
    $region59: #{tpu_custom_call.1} parent=1 // pred_check_branch
      %1637 = sbr.rel (0) target = $region61
    $region60: #{tpu_custom_call.1} parent=1 // pred_region
      %1638 = dma.done [#allocation5], 512
    $region61: #{tpu_custom_call.1} parent=1 // pred_fallthru
      _
    %1639 = vsyncpa [#allocation5], 1

</llo_original>
